<compile_context>
chip_gen: v7x
topology: tpu7x:2x2x1
jax: 0.10.0
libtpu: 0.0.40
codegen_flags: <defaults>
</compile_context>

<pallas_src>
import functools

import jax
import jax.numpy as jnp
import numpy as np
from jax.experimental import pallas as pl
from jax.experimental.pallas import tpu as pltpu

# ----------------------------- hyper-params (small, synthetic) --------------
KEY_DIM = 32
VALUE_DIM = 32
SUMMARY_DIM = 32
QUESTION_NUM = 20
CONCEPT_NUM = 16
PAD_INDEX = 0
BATCH = 2
SEQ = 8
OUT_PAD = 128           # lane-dense output width (sliced to 1 in the wrapper)


# ----------------------------- Pallas kernel --------------------------------
def dkvmn_kernel(idx_ref, emb_ref, wcat_ref, wsrt_ref, bias_ref, expm_ref,
                 out_ref, *, T, Bp, iep, qep):
    V, K, C, S = VALUE_DIM, KEY_DIM, CONCEPT_NUM, SUMMARY_DIM
    VC = V * C
    TB = T * Bp            # interaction rows (time-major, batch-padded)
    TBall = TB + Bp        # + the trailing target-question rows

    # ---------------- integer indices (single int32 slab) -------------------
    idx = idx_ref[...]                                        # (TBall, 1) int32
    row = jax.lax.broadcasted_iota(jnp.int32, (TBall, 1), 0)
    # interaction -> question-id transform on the T*Bp interaction rows; the
    # trailing Bp target rows are already question ids (matches PyTorch, which
    # embeds target_id directly without the transform).
    qid = jnp.where(row < TB,
                    idx - QUESTION_NUM * (idx > QUESTION_NUM).astype(jnp.int32),
                    idx)

    # ---------------- in-kernel embedding gathers (one-hot MXU matmuls) -----
    i_tab = emb_ref[0:iep, :]                                 # (iep, V)
    q_tab = emb_ref[iep:iep + qep, :]                         # (qep, K)
    onehot_i = (jax.lax.broadcasted_iota(jnp.int32, (TB, iep), 1)
                == idx[:TB]).astype(jnp.float32)              # (TB, iep)
    onehot_q = (jax.lax.broadcasted_iota(jnp.int32, (TBall, qep), 1)
                == qid).astype(jnp.float32)                   # (TBall, qep)
    iv_all = jnp.dot(onehot_i, i_tab, preferred_element_type=jnp.float32)
    qv_all = jnp.dot(onehot_q, q_tab, preferred_element_type=jnp.float32)

    # ---------------- packed parameter views (static slices) ----------------
    wo_pad = wcat_ref[:, 0:OUT_PAD]                           # (S, 128)
    wea = wcat_ref[:, OUT_PAD:OUT_PAD + 2 * V]                # (V, 2V) = [we|wa]
    key_mem = wcat_ref[:, OUT_PAD + 2 * V:OUT_PAD + 2 * V + C]  # (K, C)
    rexp_t = wsrt_ref[0:VC, :]                                # (V*C, V)
    ws = wsrt_ref[VC:VC + V + K, :]                           # (V+K, S)
    ea_b = bias_ref[0:1, 0:2 * V]                             # (1, 2V) = [be|ba]
    bs = bias_ref[1:2, 0:S]                                   # (1, S)
    bo = bias_ref[2:3, :]                                     # (1, 128)
    rexp = expm_ref[0:V, :]                                   # (V, V*C)
    qexp = expm_ref[V:V + C, :]                               # (C, V*C)
    m0 = expm_ref[V + C:V + C + 1, :]                         # (1, V*C)

    # ---------------- fused erase/add linear (one MXU dot), hoisted ---------
    ea = jnp.dot(iv_all, wea, preferred_element_type=jnp.float32) + ea_b
    e_all = jax.nn.sigmoid(ea[:, 0:V])                        # (TB, V)
    a_all = jnp.tanh(ea[:, V:2 * V])                          # (TB, V)

    # ---------------- one softmax for all timesteps + the target read -------
    logits = jnp.dot(qv_all, key_mem, preferred_element_type=jnp.float32)
    p = jnp.exp(logits - jnp.max(logits, axis=-1, keepdims=True))
    w_all = p / jnp.sum(p, axis=-1, keepdims=True)            # exact normalize

    # ---------------- flattened outer products (two MXU dots total) ---------
    # e_rep[:, v*C+c] = e[:, v] ; w_til[:, v*C+c] = w[:, c]
    ea_stack = jnp.concatenate([e_all, a_all], axis=0)        # (2*TB, V)
    ea_rep = jnp.dot(ea_stack, rexp, preferred_element_type=jnp.float32)
    w_til = jnp.dot(w_all, qexp, preferred_element_type=jnp.float32)
    erase_all = ea_rep[0:TB] * w_til[0:TB]                    # (TB, V*C)
    add_all = ea_rep[TB:2 * TB] * w_til[0:TB]                 # (TB, V*C)
    wt_til = w_til[TB:TBall]                                  # (Bp, V*C)

    # ---------------- tiny unrolled elementwise recurrence ------------------
    mem = jnp.broadcast_to(m0, (Bp, VC))                      # (Bp, V*C)
    for t in range(T):                                        # T small / static
        lo = t * Bp                                           # sublane-aligned
        mem = mem * (1.0 - erase_all[lo:lo + Bp]) + add_all[lo:lo + Bp]

    # ---------------- read / summary / lane-dense output --------------------
    read = jnp.dot(mem * wt_til, rexp_t, preferred_element_type=jnp.float32)
    qvt = qv_all[TB:TBall]                                    # (Bp, K)
    summary = jnp.tanh(
        jnp.dot(jnp.concatenate([read, qvt], axis=1), ws,
                preferred_element_type=jnp.float32) + bs)     # (Bp, S)
    out_ref[...] = (jnp.dot(summary, wo_pad, preferred_element_type=jnp.float32)
                    + bo)                                     # (Bp, 128)


# ----------------------------- parameter init -------------------------------
def init_params(key):
    ks = jax.random.split(key, 8)
    stdev = 1.0 / np.sqrt(CONCEPT_NUM + KEY_DIM)

    q_emb = jax.random.normal(ks[0], (QUESTION_NUM + 1, KEY_DIM), jnp.float32)
    q_emb = q_emb.at[PAD_INDEX].set(0.0)            # padding_idx
    i_emb = jax.random.normal(ks[1], (2 * QUESTION_NUM + 1, VALUE_DIM), jnp.float32)
    i_emb = i_emb.at[PAD_INDEX].set(0.0)            # padding_idx

    def linear(k, fan_in, fan_out):
        bound = 1.0 / np.sqrt(fan_in)
        kw, kb = jax.random.split(k)
        W = jax.random.uniform(kw, (fan_in, fan_out), jnp.float32, -bound, bound)
        b = jax.random.uniform(kb, (1, fan_out), jnp.float32, -bound, bound)
        return W, b

    we, be = linear(ks[2], VALUE_DIM, VALUE_DIM)
    wa, ba = linear(ks[3], VALUE_DIM, VALUE_DIM)
    ws, bs = linear(ks[4], VALUE_DIM + KEY_DIM, SUMMARY_DIM)   # kept un-split
    wo, bo = linear(ks[5], SUMMARY_DIM, 1)

    key_mem = jax.random.uniform(ks[6], (KEY_DIM, CONCEPT_NUM), jnp.float32, -stdev, stdev)
    m0 = jax.random.uniform(ks[7], (VALUE_DIM, CONCEPT_NUM), jnp.float32, -stdev, stdev)

    return dict(q_emb=q_emb, i_emb=i_emb, we=we, be=be, wa=wa, ba=ba,
                ws=ws, bs=bs, wo=wo, bo=bo, key_mem=key_mem, m0=m0)


# ----------------------------- wrapper ---------------------------------------
@jax.jit
def dkvmn_forward(params, inp, target_id):
    # packing layout below assumes these dims coincide (all 32 here)
    assert KEY_DIM == VALUE_DIM == SUMMARY_DIM

    B, T = inp.shape
    Bp = ((B + 7) // 8) * 8                                   # pad batch to sublanes
    pad = Bp - B
    TB = T * Bp
    iep = ((params['i_emb'].shape[0] + 7) // 8) * 8           # 41 -> 48
    qep = ((params['q_emb'].shape[0] + 7) // 8) * 8           # 21 -> 24

    # ---- slab 1: int32 indices ((T+1)*Bp, 1): interactions (time-major,
    #      batch-padded with PAD_INDEX) then the target question ids ----------
    inter_tm = jnp.pad(jnp.transpose(inp, (1, 0)), ((0, 0), (0, pad)))   # (T, Bp)
    tid = jnp.pad(target_id.reshape(-1), (0, pad))                        # (Bp,)
    idx = jnp.concatenate([inter_tm.reshape(TB), tid]).astype(jnp.int32)
    idx = idx.reshape(TB + Bp, 1)

    # ---- slab 2: embedding tables [i_emb (row-padded) ; q_emb (row-padded)] --
    emb = jnp.zeros((iep + qep, VALUE_DIM), jnp.float32)
    emb = emb.at[0:params['i_emb'].shape[0]].set(params['i_emb'])
    emb = emb.at[iep:iep + params['q_emb'].shape[0]].set(params['q_emb'])

    # ---- slab 3: [wo (padded to 128 lanes) | we | wa | key_memory] ----------
    wo_pad = jnp.zeros((SUMMARY_DIM, OUT_PAD), jnp.float32).at[:, :1].set(params['wo'])
    wcat = jnp.concatenate([wo_pad, params['we'], params['wa'], params['key_mem']],
                           axis=1)                                        # (32, 208)

    # ---- constant one-hot expansion matrices (host-side, no in-kernel reshapes)
    vc = VALUE_DIM * CONCEPT_NUM
    j = np.arange(vc)
    rexp_np = ((j[None, :] // CONCEPT_NUM)
               == np.arange(VALUE_DIM)[:, None]).astype(np.float32)        # (V, V*C)
    qexp_np = ((j[None, :] % CONCEPT_NUM)
               == np.arange(CONCEPT_NUM)[:, None]).astype(np.float32)      # (C, V*C)

    # ---- slab 4: [rexp^T ; ws] — tall (V*C + V + K, 32) ---------------------
    wsrt = jnp.concatenate([jnp.asarray(rexp_np.T), params['ws']], axis=0)  # (576, 32)

    # ---- slab 5: bias rows (8, 128): row0=[be|ba], row1=bs, row2=bo(padded) -
    bias = jnp.zeros((8, OUT_PAD), jnp.float32)
    bias = bias.at[0, 0:VALUE_DIM].set(params['be'][0])
    bias = bias.at[0, VALUE_DIM:2 * VALUE_DIM].set(params['ba'][0])
    bias = bias.at[1, 0:SUMMARY_DIM].set(params['bs'][0])
    bias = bias.at[2, 0:1].set(params['bo'][0])

    # ---- slab 6: [rexp ; qexp ; m0_flat] — (V + C + 1, V*C) -----------------
    expm = jnp.concatenate([jnp.asarray(rexp_np), jnp.asarray(qexp_np),
                            params['m0'].reshape(1, vc)], axis=0)          # (49, 512)

    vmem = pl.BlockSpec(memory_space=pltpu.MemorySpace.VMEM)
    kernel = functools.partial(dkvmn_kernel, T=T, Bp=Bp, iep=iep, qep=qep)

    # Gridless: the whole problem fits comfortably in VMEM at these sizes.
    # (For large B add a ("parallel",) grid over Bp/8 row tiles — v7x has 2 TCs.)
    out = pl.pallas_call(
        kernel,
        out_shape=jax.ShapeDtypeStruct((Bp, OUT_PAD), jnp.float32),
        in_specs=[vmem] * 6,
        out_specs=vmem,
    )(idx, emb, wcat, wsrt, bias, expm)
    return out[:B, :1]


# ----------------------------- pure-JAX reference ----------------------------
def dkvmn_reference(params, inp, target_id):
    B, T = inp.shape
    key_mem = params['key_mem']
    mem = jnp.broadcast_to(params['m0'][None], (B, VALUE_DIM, CONCEPT_NUM))

    def corr(qv):
        return jax.nn.softmax(qv @ key_mem, axis=-1)

    for t in range(T):
        inter = inp[:, t]
        iv = params['i_emb'][inter]
        qid = inter - QUESTION_NUM * (inter > QUESTION_NUM).astype(inter.dtype)
        qv = params['q_emb'][qid]
        e = jax.nn.sigmoid(iv @ params['we'] + params['be'][0])
        a = jnp.tanh(iv @ params['wa'] + params['ba'][0])
        w = corr(qv)
        erase = e[:, :, None] * w[:, None, :]
        add = a[:, :, None] * w[:, None, :]
        mem = mem * (1.0 - erase) + add

    tid = target_id.reshape(-1)
    qvt = params['q_emb'][tid]
    wt = corr(qvt)
    read = jnp.sum(mem * wt[:, None, :], axis=-1)
    summary = jnp.tanh(jnp.concatenate([read, qvt], axis=1) @ params['ws']
                       + params['bs'][0])
    return summary @ params['wo'] + params['bo'][0]


# ----------------------------- main -------------------------------------------
if __name__ == "__main__":
    root = jax.random.PRNGKey(0)
    k_params, k_inp, k_tgt = jax.random.split(root, 3)

    params = init_params(k_params)
    # interactions in [1, 2*question_num], target question ids in [1, question_num]
    inp = jax.random.randint(k_inp, (BATCH, SEQ), 1, 2 * QUESTION_NUM + 1, dtype=jnp.int32)
    target_id = jax.random.randint(k_tgt, (BATCH, 1), 1, QUESTION_NUM + 1, dtype=jnp.int32)

    out = jax.block_until_ready(dkvmn_forward(params, inp, target_id))

    with jax.default_matmul_precision("float32"):
        ref = jax.block_until_ready(dkvmn_reference(params, inp, target_id))

    # modest tolerance: kernel matmuls run on the MXU (f32 accumulate); any
    # residual difference vs. the XLA reference is well below this.
    np.testing.assert_allclose(np.asarray(out), np.asarray(ref), rtol=2e-3, atol=2e-3)

    print("KERNEL_OK")
</pallas_src>

<mosaic_0001>
module attributes {stable_mosaic.version = 11 : i64} {
  func.func @dkvmn_kernel(%arg0: memref<72x1xi32, #tpu.memory_space<vmem>>, %arg1: memref<72x32xf32, #tpu.memory_space<vmem>>, %arg2: memref<32x208xf32, #tpu.memory_space<vmem>>, %arg3: memref<576x32xf32, #tpu.memory_space<vmem>>, %arg4: memref<8x128xf32, #tpu.memory_space<vmem>>, %arg5: memref<49x512xf32, #tpu.memory_space<vmem>>, %arg6: memref<8x128xf32, #tpu.memory_space<vmem>>) attributes {dimension_semantics = [], scalar_prefetch = 0 : i64, scratch_operands = 0 : i64, tpu.core_type = #tpu.core_type<tc>} {
    %c0 = arith.constant 0 : index
    %c0_0 = arith.constant 0 : index
    %0 = vector.load %arg0[%c0, %c0_0] : memref<72x1xi32, #tpu.memory_space<vmem>>, vector<72x1xi32>
    %1 = tpu.iota {dimensions = array<i32: 0>} : vector<72x1xi32>
    %c64_i32 = arith.constant 64 : i32
    %2 = vector.broadcast %c64_i32 : i32 to vector<72x1xi32>
    %3 = arith.cmpi slt, %1, %2 : vector<72x1xi32>
    %c20_i32 = arith.constant 20 : i32
    %4 = vector.broadcast %c20_i32 : i32 to vector<72x1xi32>
    %5 = arith.cmpi sgt, %0, %4 : vector<72x1xi32>
    %6 = arith.extui %5 : vector<72x1xi1> to vector<72x1xi32>
    %c20_i32_1 = arith.constant 20 : i32
    %7 = vector.broadcast %c20_i32_1 : i32 to vector<72x1xi32>
    %8 = arith.muli %7, %6 : vector<72x1xi32>
    %9 = arith.subi %0, %8 : vector<72x1xi32>
    %10 = arith.select %3, %9, %0 : vector<72x1xi1>, vector<72x1xi32>
    %c0_2 = arith.constant 0 : index
    %c0_3 = arith.constant 0 : index
    %11 = vector.load %arg1[%c0_2, %c0_3] : memref<72x32xf32, #tpu.memory_space<vmem>>, vector<48x32xf32>
    %c48 = arith.constant 48 : index
    %c0_4 = arith.constant 0 : index
    %12 = vector.load %arg1[%c48, %c0_4] : memref<72x32xf32, #tpu.memory_space<vmem>>, vector<24x32xf32>
    %13 = tpu.iota {dimensions = array<i32: 1>} : vector<64x48xi32>
    %14 = vector.extract_strided_slice %0 {offsets = [0, 0], sizes = [64, 1], strides = [1, 1]} : vector<72x1xi32> to vector<64x1xi32>
    %15 = vector.broadcast %14 : vector<64x1xi32> to vector<64x48xi32>
    %16 = arith.cmpi eq, %13, %15 : vector<64x48xi32>
    %17 = arith.extui %16 : vector<64x48xi1> to vector<64x48xi32>
    %18 = arith.sitofp %17 : vector<64x48xi32> to vector<64x48xf32>
    %19 = tpu.iota {dimensions = array<i32: 1>} : vector<72x24xi32>
    %20 = vector.broadcast %10 : vector<72x1xi32> to vector<72x24xi32>
    %21 = arith.cmpi eq, %19, %20 : vector<72x24xi32>
    %22 = arith.extui %21 : vector<72x24xi1> to vector<72x24xi32>
    %23 = arith.sitofp %22 : vector<72x24xi32> to vector<72x24xf32>
    %cst = arith.constant dense<0.000000e+00> : vector<64x32xf32>
    %24 = tpu.matmul %18, %11, %cst {dimension_numbers = #tpu.dot_dimension_numbers<[1], [0], [0], [1], [0, 0, 1, 1], [], []>} : vector<64x48xf32>, vector<48x32xf32>, vector<64x32xf32> -> vector<64x32xf32>
    %cst_5 = arith.constant dense<0.000000e+00> : vector<72x32xf32>
    %25 = tpu.matmul %23, %12, %cst_5 {dimension_numbers = #tpu.dot_dimension_numbers<[1], [0], [0], [1], [0, 0, 1, 1], [], []>} : vector<72x24xf32>, vector<24x32xf32>, vector<72x32xf32> -> vector<72x32xf32>
    %c0_6 = arith.constant 0 : index
    %c0_7 = arith.constant 0 : index
    %26 = vector.load %arg2[%c0_6, %c0_7] : memref<32x208xf32, #tpu.memory_space<vmem>>, vector<32x128xf32>
    %c0_8 = arith.constant 0 : index
    %c128 = arith.constant 128 : index
    %27 = vector.load %arg2[%c0_8, %c128] : memref<32x208xf32, #tpu.memory_space<vmem>>, vector<32x64xf32>
    %c0_9 = arith.constant 0 : index
    %c192 = arith.constant 192 : index
    %28 = vector.load %arg2[%c0_9, %c192] : memref<32x208xf32, #tpu.memory_space<vmem>>, vector<32x16xf32>
    %c0_10 = arith.constant 0 : index
    %c0_11 = arith.constant 0 : index
    %29 = vector.load %arg3[%c0_10, %c0_11] : memref<576x32xf32, #tpu.memory_space<vmem>>, vector<512x32xf32>
    %c512 = arith.constant 512 : index
    %c0_12 = arith.constant 0 : index
    %30 = vector.load %arg3[%c512, %c0_12] : memref<576x32xf32, #tpu.memory_space<vmem>>, vector<64x32xf32>
    %c0_13 = arith.constant 0 : index
    %c0_14 = arith.constant 0 : index
    %31 = vector.load %arg4[%c0_13, %c0_14] : memref<8x128xf32, #tpu.memory_space<vmem>>, vector<1x64xf32>
    %c1 = arith.constant 1 : index
    %c0_15 = arith.constant 0 : index
    %32 = vector.load %arg4[%c1, %c0_15] : memref<8x128xf32, #tpu.memory_space<vmem>>, vector<1x32xf32>
    %c2 = arith.constant 2 : index
    %c0_16 = arith.constant 0 : index
    %33 = vector.load %arg4[%c2, %c0_16] : memref<8x128xf32, #tpu.memory_space<vmem>>, vector<1x128xf32>
    %c0_17 = arith.constant 0 : index
    %c0_18 = arith.constant 0 : index
    %34 = vector.load %arg5[%c0_17, %c0_18] : memref<49x512xf32, #tpu.memory_space<vmem>>, vector<32x512xf32>
    %c32 = arith.constant 32 : index
    %c0_19 = arith.constant 0 : index
    %35 = vector.load %arg5[%c32, %c0_19] : memref<49x512xf32, #tpu.memory_space<vmem>>, vector<16x512xf32>
    %c48_20 = arith.constant 48 : index
    %c0_21 = arith.constant 0 : index
    %36 = vector.load %arg5[%c48_20, %c0_21] : memref<49x512xf32, #tpu.memory_space<vmem>>, vector<1x512xf32>
    %cst_22 = arith.constant dense<0.000000e+00> : vector<64x64xf32>
    %37 = tpu.matmul %24, %27, %cst_22 {dimension_numbers = #tpu.dot_dimension_numbers<[1], [0], [0], [1], [0, 0, 1, 1], [], []>} : vector<64x32xf32>, vector<32x64xf32>, vector<64x64xf32> -> vector<64x64xf32>
    %38 = vector.broadcast %31 : vector<1x64xf32> to vector<64x64xf32>
    %39 = arith.addf %37, %38 : vector<64x64xf32>
    %40 = vector.extract_strided_slice %39 {offsets = [0, 0], sizes = [64, 32], strides = [1, 1]} : vector<64x64xf32> to vector<64x32xf32>
    %41 = arith.negf %40 : vector<64x32xf32>
    %42 = math.exp %41 : vector<64x32xf32>
    %cst_23 = arith.constant 1.000000e+00 : f32
    %43 = vector.broadcast %cst_23 : f32 to vector<64x32xf32>
    %44 = arith.addf %43, %42 : vector<64x32xf32>
    %45 = arith.divf %43, %44 : vector<64x32xf32>
    %46 = vector.extract_strided_slice %39 {offsets = [0, 32], sizes = [64, 32], strides = [1, 1]} : vector<64x64xf32> to vector<64x32xf32>
    %47 = math.tanh %46 : vector<64x32xf32>
    %cst_24 = arith.constant dense<0.000000e+00> : vector<72x16xf32>
    %48 = tpu.matmul %25, %28, %cst_24 {dimension_numbers = #tpu.dot_dimension_numbers<[1], [0], [0], [1], [0, 0, 1, 1], [], []>} : vector<72x32xf32>, vector<32x16xf32>, vector<72x16xf32> -> vector<72x16xf32>
    %cst_25 = arith.constant dense<0xFF800000> : vector<72xf32>
    %49 = vector.multi_reduction <maximumf>, %48, %cst_25 [1] : vector<72x16xf32> to vector<72xf32>
    %50 = vector.shape_cast %49 : vector<72xf32> to vector<72x1xf32>
    %51 = vector.broadcast %50 : vector<72x1xf32> to vector<72x16xf32>
    %52 = arith.subf %48, %51 : vector<72x16xf32>
    %53 = math.exp %52 : vector<72x16xf32>
    %cst_26 = arith.constant dense<0.000000e+00> : vector<72xf32>
    %54 = vector.multi_reduction <add>, %53, %cst_26 [1] : vector<72x16xf32> to vector<72xf32>
    %55 = vector.shape_cast %54 : vector<72xf32> to vector<72x1xf32>
    %56 = vector.broadcast %55 : vector<72x1xf32> to vector<72x16xf32>
    %57 = arith.divf %53, %56 : vector<72x16xf32>
    %58 = tpu.concatenate %45, %47 in 0 : vector<64x32xf32>, vector<64x32xf32> -> vector<128x32xf32>
    %cst_27 = arith.constant dense<0.000000e+00> : vector<128x512xf32>
    %59 = tpu.matmul %58, %34, %cst_27 {dimension_numbers = #tpu.dot_dimension_numbers<[1], [0], [0], [1], [0, 0, 1, 1], [], []>} : vector<128x32xf32>, vector<32x512xf32>, vector<128x512xf32> -> vector<128x512xf32>
    %cst_28 = arith.constant dense<0.000000e+00> : vector<72x512xf32>
    %60 = tpu.matmul %57, %35, %cst_28 {dimension_numbers = #tpu.dot_dimension_numbers<[1], [0], [0], [1], [0, 0, 1, 1], [], []>} : vector<72x16xf32>, vector<16x512xf32>, vector<72x512xf32> -> vector<72x512xf32>
    %61 = vector.extract_strided_slice %59 {offsets = [0, 0], sizes = [64, 512], strides = [1, 1]} : vector<128x512xf32> to vector<64x512xf32>
    %62 = vector.extract_strided_slice %60 {offsets = [0, 0], sizes = [64, 512], strides = [1, 1]} : vector<72x512xf32> to vector<64x512xf32>
    %63 = arith.mulf %61, %62 : vector<64x512xf32>
    %64 = vector.extract_strided_slice %59 {offsets = [64, 0], sizes = [64, 512], strides = [1, 1]} : vector<128x512xf32> to vector<64x512xf32>
    %65 = vector.extract_strided_slice %60 {offsets = [0, 0], sizes = [64, 512], strides = [1, 1]} : vector<72x512xf32> to vector<64x512xf32>
    %66 = arith.mulf %64, %65 : vector<64x512xf32>
    %67 = vector.extract_strided_slice %60 {offsets = [64, 0], sizes = [8, 512], strides = [1, 1]} : vector<72x512xf32> to vector<8x512xf32>
    %68 = vector.shape_cast %36 : vector<1x512xf32> to vector<1x512xf32>
    %69 = vector.broadcast %68 : vector<1x512xf32> to vector<8x512xf32>
    %70 = vector.extract_strided_slice %63 {offsets = [0, 0], sizes = [8, 512], strides = [1, 1]} : vector<64x512xf32> to vector<8x512xf32>
    %cst_29 = arith.constant 1.000000e+00 : f32
    %71 = vector.broadcast %cst_29 : f32 to vector<8x512xf32>
    %72 = arith.subf %71, %70 : vector<8x512xf32>
    %73 = arith.mulf %69, %72 : vector<8x512xf32>
    %74 = vector.extract_strided_slice %66 {offsets = [0, 0], sizes = [8, 512], strides = [1, 1]} : vector<64x512xf32> to vector<8x512xf32>
    %75 = arith.addf %73, %74 : vector<8x512xf32>
    %76 = vector.extract_strided_slice %63 {offsets = [8, 0], sizes = [8, 512], strides = [1, 1]} : vector<64x512xf32> to vector<8x512xf32>
    %cst_30 = arith.constant 1.000000e+00 : f32
    %77 = vector.broadcast %cst_30 : f32 to vector<8x512xf32>
    %78 = arith.subf %77, %76 : vector<8x512xf32>
    %79 = arith.mulf %75, %78 : vector<8x512xf32>
    %80 = vector.extract_strided_slice %66 {offsets = [8, 0], sizes = [8, 512], strides = [1, 1]} : vector<64x512xf32> to vector<8x512xf32>
    %81 = arith.addf %79, %80 : vector<8x512xf32>
    %82 = vector.extract_strided_slice %63 {offsets = [16, 0], sizes = [8, 512], strides = [1, 1]} : vector<64x512xf32> to vector<8x512xf32>
    %cst_31 = arith.constant 1.000000e+00 : f32
    %83 = vector.broadcast %cst_31 : f32 to vector<8x512xf32>
    %84 = arith.subf %83, %82 : vector<8x512xf32>
    %85 = arith.mulf %81, %84 : vector<8x512xf32>
    %86 = vector.extract_strided_slice %66 {offsets = [16, 0], sizes = [8, 512], strides = [1, 1]} : vector<64x512xf32> to vector<8x512xf32>
    %87 = arith.addf %85, %86 : vector<8x512xf32>
    %88 = vector.extract_strided_slice %63 {offsets = [24, 0], sizes = [8, 512], strides = [1, 1]} : vector<64x512xf32> to vector<8x512xf32>
    %cst_32 = arith.constant 1.000000e+00 : f32
    %89 = vector.broadcast %cst_32 : f32 to vector<8x512xf32>
    %90 = arith.subf %89, %88 : vector<8x512xf32>
    %91 = arith.mulf %87, %90 : vector<8x512xf32>
    %92 = vector.extract_strided_slice %66 {offsets = [24, 0], sizes = [8, 512], strides = [1, 1]} : vector<64x512xf32> to vector<8x512xf32>
    %93 = arith.addf %91, %92 : vector<8x512xf32>
    %94 = vector.extract_strided_slice %63 {offsets = [32, 0], sizes = [8, 512], strides = [1, 1]} : vector<64x512xf32> to vector<8x512xf32>
    %cst_33 = arith.constant 1.000000e+00 : f32
    %95 = vector.broadcast %cst_33 : f32 to vector<8x512xf32>
    %96 = arith.subf %95, %94 : vector<8x512xf32>
    %97 = arith.mulf %93, %96 : vector<8x512xf32>
    %98 = vector.extract_strided_slice %66 {offsets = [32, 0], sizes = [8, 512], strides = [1, 1]} : vector<64x512xf32> to vector<8x512xf32>
    %99 = arith.addf %97, %98 : vector<8x512xf32>
    %100 = vector.extract_strided_slice %63 {offsets = [40, 0], sizes = [8, 512], strides = [1, 1]} : vector<64x512xf32> to vector<8x512xf32>
    %cst_34 = arith.constant 1.000000e+00 : f32
    %101 = vector.broadcast %cst_34 : f32 to vector<8x512xf32>
    %102 = arith.subf %101, %100 : vector<8x512xf32>
    %103 = arith.mulf %99, %102 : vector<8x512xf32>
    %104 = vector.extract_strided_slice %66 {offsets = [40, 0], sizes = [8, 512], strides = [1, 1]} : vector<64x512xf32> to vector<8x512xf32>
    %105 = arith.addf %103, %104 : vector<8x512xf32>
    %106 = vector.extract_strided_slice %63 {offsets = [48, 0], sizes = [8, 512], strides = [1, 1]} : vector<64x512xf32> to vector<8x512xf32>
    %cst_35 = arith.constant 1.000000e+00 : f32
    %107 = vector.broadcast %cst_35 : f32 to vector<8x512xf32>
    %108 = arith.subf %107, %106 : vector<8x512xf32>
    %109 = arith.mulf %105, %108 : vector<8x512xf32>
    %110 = vector.extract_strided_slice %66 {offsets = [48, 0], sizes = [8, 512], strides = [1, 1]} : vector<64x512xf32> to vector<8x512xf32>
    %111 = arith.addf %109, %110 : vector<8x512xf32>
    %112 = vector.extract_strided_slice %63 {offsets = [56, 0], sizes = [8, 512], strides = [1, 1]} : vector<64x512xf32> to vector<8x512xf32>
    %cst_36 = arith.constant 1.000000e+00 : f32
    %113 = vector.broadcast %cst_36 : f32 to vector<8x512xf32>
    %114 = arith.subf %113, %112 : vector<8x512xf32>
    %115 = arith.mulf %111, %114 : vector<8x512xf32>
    %116 = vector.extract_strided_slice %66 {offsets = [56, 0], sizes = [8, 512], strides = [1, 1]} : vector<64x512xf32> to vector<8x512xf32>
    %117 = arith.addf %115, %116 : vector<8x512xf32>
    %118 = arith.mulf %117, %67 : vector<8x512xf32>
    %cst_37 = arith.constant dense<0.000000e+00> : vector<8x32xf32>
    %119 = tpu.matmul %118, %29, %cst_37 {dimension_numbers = #tpu.dot_dimension_numbers<[1], [0], [0], [1], [0, 0, 1, 1], [], []>} : vector<8x512xf32>, vector<512x32xf32>, vector<8x32xf32> -> vector<8x32xf32>
    %120 = vector.extract_strided_slice %25 {offsets = [64, 0], sizes = [8, 32], strides = [1, 1]} : vector<72x32xf32> to vector<8x32xf32>
    %121 = tpu.concatenate %119, %120 in 1 : vector<8x32xf32>, vector<8x32xf32> -> vector<8x64xf32>
    %cst_38 = arith.constant dense<0.000000e+00> : vector<8x32xf32>
    %122 = tpu.matmul %121, %30, %cst_38 {dimension_numbers = #tpu.dot_dimension_numbers<[1], [0], [0], [1], [0, 0, 1, 1], [], []>} : vector<8x64xf32>, vector<64x32xf32>, vector<8x32xf32> -> vector<8x32xf32>
    %123 = vector.broadcast %32 : vector<1x32xf32> to vector<8x32xf32>
    %124 = arith.addf %122, %123 : vector<8x32xf32>
    %125 = math.tanh %124 : vector<8x32xf32>
    %cst_39 = arith.constant dense<0.000000e+00> : vector<8x128xf32>
    %126 = tpu.matmul %125, %26, %cst_39 {dimension_numbers = #tpu.dot_dimension_numbers<[1], [0], [0], [1], [0, 0, 1, 1], [], []>} : vector<8x32xf32>, vector<32x128xf32>, vector<8x128xf32> -> vector<8x128xf32>
    %127 = vector.broadcast %33 : vector<1x128xf32> to vector<8x128xf32>
    %128 = arith.addf %126, %127 : vector<8x128xf32>
    %c0_40 = arith.constant 0 : index
    %c0_41 = arith.constant 0 : index
    %129 = vector.load %arg6[%c0_40, %c0_41] : memref<8x128xf32, #tpu.memory_space<vmem>>, vector<8x128xf32>
    tpu.vector_store %arg6[%c0_40, %c0_41], %128 {strides = array<i32>} : memref<8x128xf32, #tpu.memory_space<vmem>>, vector<8x128xf32>,
    return
  }
}

</mosaic_0001>

<llo_original>
// kernel: dkvmn_forward.1
$region0: #{dkvmn_forward.1}
  #allocation0 [shape = 'u32[]', space=smem, size = 0x4, offset = 0x4, fixed_abs, tag = 'smem constant byte address 0x4 - core index']
  #allocation1 [shape = 'u32[144,128]{1,0:T(1,128)}', space=vmem, size = 0x12000, scoped, tag = 'internal scratch']
  %s0 = inlined_call_operand.vmem [shape: s32[72,1], index: 0, kind: input, shape index: {}]
  %s1 = inlined_call_operand.vmem [shape: f32[72,32], index: 1, kind: input, shape index: {}]
  %s2 = inlined_call_operand.vmem [shape: f32[32,208], index: 2, kind: input, shape index: {}]
  %s3 = inlined_call_operand.vmem [shape: f32[576,32], index: 3, kind: input, shape index: {}]
  %s4 = inlined_call_operand.vmem [shape: f32[8,128], index: 4, kind: input, shape index: {}]
  %s5 = inlined_call_operand.vmem [shape: f32[49,512], index: 5, kind: input, shape index: {}]
  %s6 = inlined_call_operand.vmem [shape: f32[8,128], index: 6, kind: output, shape index: {}]
  %s7 = sld [smem:[#allocation0]]
  $region34: #{dkvmn_forward.1} parent=0
    _
  %s9 = ssub.s32 1, %s7
  %s10 = scalar_select 0, %s9, %s7
  // Predicated region
  $region2: #{dkvmn_forward.1} parent=0 // pred_check
    _
  $region3: #{dkvmn_forward.1} parent=0 // pred_check_branch
    %12 = sbr.rel (0) target = $region5
  $region4: #{dkvmn_forward.1} parent=0 // pred_region
    _
  $region5: #{dkvmn_forward.1} parent=0 // pred_fallthru
    _
  // Predicated region
  $region6: #{dkvmn_forward.1} parent=0 // pred_check
    _
  $region7: #{dkvmn_forward.1} parent=0 // pred_check_branch
    %14 = sbr.rel (0) target = $region9
  $region8: #{dkvmn_forward.1} parent=0 // pred_region
    _
  $region9: #{dkvmn_forward.1} parent=0 // pred_fallthru
    _
  // Predicated region
  $region10: #{dkvmn_forward.1} parent=0 // pred_check
    _
  $region11: #{dkvmn_forward.1} parent=0 // pred_check_branch
    %16 = sbr.rel (0) target = $region13
  $region12: #{dkvmn_forward.1} parent=0 // pred_region
    _
  $region13: #{dkvmn_forward.1} parent=0 // pred_fallthru
    _
  // Predicated region
  $region14: #{dkvmn_forward.1} parent=0 // pred_check
    _
  $region15: #{dkvmn_forward.1} parent=0 // pred_check_branch
    %18 = sbr.rel (0) target = $region17
  $region16: #{dkvmn_forward.1} parent=0 // pred_region
    _
  $region17: #{dkvmn_forward.1} parent=0 // pred_fallthru
    _
  // Predicated region
  $region18: #{dkvmn_forward.1} parent=0 // pred_check
    _
  $region19: #{dkvmn_forward.1} parent=0 // pred_check_branch
    %20 = sbr.rel (0) target = $region21
  $region20: #{dkvmn_forward.1} parent=0 // pred_region
    _
  $region21: #{dkvmn_forward.1} parent=0 // pred_fallthru
    _
  // Predicated region
  $region22: #{dkvmn_forward.1} parent=0 // pred_check
    _
  $region23: #{dkvmn_forward.1} parent=0 // pred_check_branch
    %22 = sbr.rel (0) target = $region25
  $region24: #{dkvmn_forward.1} parent=0 // pred_region
    _
  $region25: #{dkvmn_forward.1} parent=0 // pred_fallthru
    _
  %v23 = vld [vmem:[%s0] sm:$0xff]
  %v24 = vld [vmem:[%s0 + $0x8] sm:$0xff]
  %v25 = vld [vmem:[%s0 + $0x10] sm:$0xff]
  %v26 = vld [vmem:[%s0 + $0x18] sm:$0xff]
  %v27 = vld [vmem:[%s0 + $0x20] sm:$0xff]
  %v28 = vld [vmem:[%s0 + $0x28] sm:$0xff]
  %v29 = vld [vmem:[%s0 + $0x30] sm:$0xff]
  %v30 = vld [vmem:[%s0 + $0x38] sm:$0xff]
  %v31 = vld [vmem:[%s0 + $0x40] sm:$0xff]
  %v32 = vlaneseq
  %v33 = vshrl.u32 %v32, 7
  %v34 = vadd.s32 %v33, 8
  %v35 = vadd.s32 %v33, 16
  %v36 = vadd.s32 %v33, 24
  %v37 = vadd.s32 %v33, 32
  %v38 = vadd.s32 %v33, 40
  %v39 = vadd.s32 %v33, 48
  %v40 = vadd.s32 %v33, 56
  %v41 = vadd.s32 %v33, 64
  %vm42 = vcmp.lt.s32.totalorder %v33, 64
  %vm43 = vcmp.lt.s32.totalorder %v34, 64
  %vm44 = vcmp.lt.s32.totalorder %v35, 64
  %vm45 = vcmp.lt.s32.totalorder %v36, 64
  %vm46 = vcmp.lt.s32.totalorder %v37, 64
  %vm47 = vcmp.lt.s32.totalorder %v38, 64
  %vm48 = vcmp.lt.s32.totalorder %v39, 64
  %vm49 = vcmp.lt.s32.totalorder %v40, 64
  %vm50 = vcmp.lt.s32.totalorder %v41, 64
  %vm51 = vcmp.gt.s32.totalorder %v23, 20
  %vm52 = vcmp.gt.s32.totalorder %v24, 20
  %vm53 = vcmp.gt.s32.totalorder %v25, 20
  %vm54 = vcmp.gt.s32.totalorder %v26, 20
  %vm55 = vcmp.gt.s32.totalorder %v27, 20
  %vm56 = vcmp.gt.s32.totalorder %v28, 20
  %vm57 = vcmp.gt.s32.totalorder %v29, 20
  %vm58 = vcmp.gt.s32.totalorder %v30, 20
  %vm59 = vcmp.gt.s32.totalorder %v31, 20
  %v60 = vsel %vm51, 1, 0
  %v61 = vsel %vm52, 1, 0
  %v62 = vsel %vm53, 1, 0
  %v63 = vsel %vm54, 1, 0
  %v64 = vsel %vm55, 1, 0
  %v65 = vsel %vm56, 1, 0
  %v66 = vsel %vm57, 1, 0
  %v67 = vsel %vm58, 1, 0
  %v68 = vsel %vm59, 1, 0
  %v69 = vmul.u32 %v60, 20
  %v70 = vmul.u32 %v61, 20
  %v71 = vmul.u32 %v62, 20
  %v72 = vmul.u32 %v63, 20
  %v73 = vmul.u32 %v64, 20
  %v74 = vmul.u32 %v65, 20
  %v75 = vmul.u32 %v66, 20
  %v76 = vmul.u32 %v67, 20
  %v77 = vmul.u32 %v68, 20
  %v78 = vsub.s32 %v23, %v69
  %v79 = vsub.s32 %v24, %v70
  %v80 = vsub.s32 %v25, %v71
  %v81 = vsub.s32 %v26, %v72
  %v82 = vsub.s32 %v27, %v73
  %v83 = vsub.s32 %v28, %v74
  %v84 = vsub.s32 %v29, %v75
  %v85 = vsub.s32 %v30, %v76
  %v86 = vsub.s32 %v31, %v77
  %v87 = vsel %vm42, %v78, %v23
  %v88 = vsel %vm43, %v79, %v24
  %v89 = vsel %vm44, %v80, %v25
  %v90 = vsel %vm45, %v81, %v26
  %v91 = vsel %vm46, %v82, %v27
  %v92 = vsel %vm47, %v83, %v28
  %v93 = vsel %vm48, %v84, %v29
  %v94 = vsel %vm49, %v85, %v30
  %v95 = vsel %vm50, %v86, %v31
  %v96 = vld [vmem:[%s1] sm:$0xff]
  %v97 = vld [vmem:[%s1 + $0x8] sm:$0xff]
  %v98 = vld [vmem:[%s1 + $0x10] sm:$0xff]
  %v99 = vld [vmem:[%s1 + $0x18] sm:$0xff]
  %v100 = vld [vmem:[%s1 + $0x20] sm:$0xff]
  %v101 = vld [vmem:[%s1 + $0x28] sm:$0xff]
  %v102 = vld [vmem:[%s1 + $0x30] sm:$0xff]
  %v103 = vld [vmem:[%s1 + $0x38] sm:$0xff]
  %v104 = vld [vmem:[%s1 + $0x40] sm:$0xff]
  %v105 = vlaneseq
  %v106 = vand.u32 %v105, 127
  %107 = vset.pattern.permute.xlu0 0
  %108 = vperm.xlu0 %107, %v23
  %v109 = vpop.permute.xlu0 %108
  %110 = vset.pattern.permute.xlu0 0
  %111 = vperm.xlu0 %110, %v24
  %v112 = vpop.permute.xlu0 %111
  %113 = vset.pattern.permute.xlu0 0
  %114 = vperm.xlu0 %113, %v25
  %v115 = vpop.permute.xlu0 %114
  %116 = vset.pattern.permute.xlu0 0
  %117 = vperm.xlu0 %116, %v26
  %v118 = vpop.permute.xlu0 %117
  %119 = vset.pattern.permute.xlu0 0
  %120 = vperm.xlu0 %119, %v27
  %v121 = vpop.permute.xlu0 %120
  %122 = vset.pattern.permute.xlu0 0
  %123 = vperm.xlu0 %122, %v28
  %v124 = vpop.permute.xlu0 %123
  %125 = vset.pattern.permute.xlu0 0
  %126 = vperm.xlu0 %125, %v29
  %v127 = vpop.permute.xlu0 %126
  %128 = vset.pattern.permute.xlu0 0
  %129 = vperm.xlu0 %128, %v30
  %v130 = vpop.permute.xlu0 %129
  %vm131 = vcmp.eq.s32.totalorder %v106, %v109
  %vm132 = vcmp.eq.s32.totalorder %v106, %v112
  %vm133 = vcmp.eq.s32.totalorder %v106, %v115
  %vm134 = vcmp.eq.s32.totalorder %v106, %v118
  %vm135 = vcmp.eq.s32.totalorder %v106, %v121
  %vm136 = vcmp.eq.s32.totalorder %v106, %v124
  %vm137 = vcmp.eq.s32.totalorder %v106, %v127
  %vm138 = vcmp.eq.s32.totalorder %v106, %v130
  %v139 = vsel %vm131, 1, 0
  %v140 = vsel %vm132, 1, 0
  %v141 = vsel %vm133, 1, 0
  %v142 = vsel %vm134, 1, 0
  %v143 = vsel %vm135, 1, 0
  %v144 = vsel %vm136, 1, 0
  %v145 = vsel %vm137, 1, 0
  %v146 = vsel %vm138, 1, 0
  %v147 = vcvt.s32.f32 %v139
  %v148 = vcvt.s32.f32 %v140
  %v149 = vcvt.s32.f32 %v141
  %v150 = vcvt.s32.f32 %v142
  %v151 = vcvt.s32.f32 %v143
  %v152 = vcvt.s32.f32 %v144
  %v153 = vcvt.s32.f32 %v145
  %v154 = vcvt.s32.f32 %v146
  %155 = vset.pattern.permute.xlu0 0
  %156 = vperm.xlu0 %155, %v87
  %v157 = vpop.permute.xlu0 %156
  %158 = vset.pattern.permute.xlu0 0
  %159 = vperm.xlu0 %158, %v88
  %v160 = vpop.permute.xlu0 %159
  %161 = vset.pattern.permute.xlu0 0
  %162 = vperm.xlu0 %161, %v89
  %v163 = vpop.permute.xlu0 %162
  %164 = vset.pattern.permute.xlu0 0
  %165 = vperm.xlu0 %164, %v90
  %v166 = vpop.permute.xlu0 %165
  %167 = vset.pattern.permute.xlu0 0
  %168 = vperm.xlu0 %167, %v91
  %v169 = vpop.permute.xlu0 %168
  %170 = vset.pattern.permute.xlu0 0
  %171 = vperm.xlu0 %170, %v92
  %v172 = vpop.permute.xlu0 %171
  %173 = vset.pattern.permute.xlu0 0
  %174 = vperm.xlu0 %173, %v93
  %v175 = vpop.permute.xlu0 %174
  %176 = vset.pattern.permute.xlu0 0
  %177 = vperm.xlu0 %176, %v94
  %v178 = vpop.permute.xlu0 %177
  %179 = vset.pattern.permute.xlu0 0
  %180 = vperm.xlu0 %179, %v95
  %v181 = vpop.permute.xlu0 %180
  %vm182 = vcmp.eq.s32.totalorder %v106, %v157
  %vm183 = vcmp.eq.s32.totalorder %v106, %v160
  %vm184 = vcmp.eq.s32.totalorder %v106, %v163
  %vm185 = vcmp.eq.s32.totalorder %v106, %v166
  %vm186 = vcmp.eq.s32.totalorder %v106, %v169
  %vm187 = vcmp.eq.s32.totalorder %v106, %v172
  %vm188 = vcmp.eq.s32.totalorder %v106, %v175
  %vm189 = vcmp.eq.s32.totalorder %v106, %v178
  %vm190 = vcmp.eq.s32.totalorder %v106, %v181
  %v191 = vsel %vm182, 1, 0
  %v192 = vsel %vm183, 1, 0
  %v193 = vsel %vm184, 1, 0
  %v194 = vsel %vm185, 1, 0
  %v195 = vsel %vm186, 1, 0
  %v196 = vsel %vm187, 1, 0
  %v197 = vsel %vm188, 1, 0
  %v198 = vsel %vm189, 1, 0
  %v199 = vsel %vm190, 1, 0
  %v200 = vcvt.s32.f32 %v191
  %v201 = vcvt.s32.f32 %v192
  %v202 = vcvt.s32.f32 %v193
  %v203 = vcvt.s32.f32 %v194
  %v204 = vcvt.s32.f32 %v195
  %v205 = vcvt.s32.f32 %v196
  %v206 = vcvt.s32.f32 %v197
  %v207 = vcvt.s32.f32 %v198
  %v208 = vcvt.s32.f32 %v199
  %vm209 = vcmask 392192
  %v211 = vsel %vm209, %v147, 0
  %v214 = vsel %vm209, %v148, 0
  %v217 = vsel %vm209, %v149, 0
  %v220 = vsel %vm209, %v150, 0
  %v223 = vsel %vm209, %v151, 0
  %v226 = vsel %vm209, %v152, 0
  %v229 = vsel %vm209, %v153, 0
  %v232 = vsel %vm209, %v154, 0
  %234 = vmatprep.subr.mxu0 0.0
  %235 = vmatpush1.msra.mxu0 %v96
  %236 = vmatprep.subr.mxu0 0.0
  %237 = vmatpush1.msra.mxu0 %v97
  %238 = vmatprep.subr.mxu0 0.0
  %239 = vmatpush1.msra.mxu0 %v98
  %240 = vmatprep.subr.mxu0 0.0
  %241 = vmatpush1.msra.mxu0 %v99
  %242 = vmatprep.subr.mxu0 0.0
  %243 = vmatpush1.msra.mxu0 %v100
  %244 = vmatprep.subr.mxu0 0.0
  %245 = vmatpush1.msra.mxu0 %v101
  %246 = vmatprep.subr.mxu0 0.0
  %247 = vmatpush1.msra.mxu0 0.0
  %248 = vmatprep.subr.mxu0 0.0
  %249 = vmatpush1.msra.mxu0 0.0
  %250 = vmatprep.subr.mxu0 0.0
  %251 = vmatpush1.msra.mxu0 0.0
  %252 = vmatprep.subr.mxu0 0.0
  %253 = vmatpush1.msra.mxu0 0.0
  %254 = vmatprep.subr.mxu0 0.0
  %255 = vmatpush1.msra.mxu0 0.0
  %256 = vmatprep.subr.mxu0 0.0
  %257 = vmatpush1.msra.mxu0 0.0
  %258 = vmatprep.subr.mxu0 0.0
  %259 = vmatpush1.msra.mxu0 0.0
  %260 = vmatprep.subr.mxu0 0.0
  %261 = vmatpush1.msra.mxu0 0.0
  %262 = vmatprep.subr.mxu0 0.0
  %263 = vmatpush1.msra.mxu0 0.0
  %264 = vmatprep.subr.mxu0 0.0
  %265 = vmatpush1.msra.mxu0 0.0
  %266 = vmatprep.subr.mxu0 0.0
  %267 = vmatpush1.msra.mxu0 0.0
  %268 = vmatprep.subr.mxu0 0.0
  %269 = vmatpush1.msra.mxu0 0.0
  %270 = vmatprep.subr.mxu0 0.0
  %271 = vmatpush1.msra.mxu0 0.0
  %272 = vmatprep.subr.mxu0 0.0
  %273 = vmatpush1.msra.mxu0 0.0
  %274 = vmatprep.subr.mxu0 0.0
  %275 = vmatpush1.msra.mxu0 0.0
  %276 = vmatprep.subr.mxu0 0.0
  %277 = vmatpush1.msra.mxu0 0.0
  %278 = vmatprep.subr.mxu0 0.0
  %279 = vmatpush1.msra.mxu0 0.0
  %280 = vmatprep.subr.mxu0 0.0
  %281 = vmatpush1.msra.mxu0 0.0
  %282 = vmatprep.subr.mxu0 0.0
  %283 = vmatpush1.msra.mxu0 0.0
  %284 = vmatprep.subr.mxu0 0.0
  %285 = vmatpush1.msra.mxu0 0.0
  %286 = vmatprep.subr.mxu0 0.0
  %287 = vmatpush1.msra.mxu0 0.0
  %288 = vmatprep.subr.mxu0 0.0
  %289 = vmatpush1.msra.mxu0 0.0
  %290 = vmatprep.subr.mxu0 0.0
  %291 = vmatpush1.msra.mxu0 0.0
  %292 = vmatprep.subr.mxu0 0.0
  %293 = vmatpush1.msra.mxu0 0.0
  %294 = vmatprep.subr.mxu0 0.0
  %295 = vmatpush1.msra.mxu0 0.0
  %296 = vmatprep.subr.mxu0 0.0
  %297 = vmatpush1.msra.mxu0 0.0
  %298 = vmatprep.mubr.f32.mxu0 0.0
  %299 = vmatmul.mubr.f32.gmra.mrb[0].mxu0 %v211
  %v300 = vpop.f32.mrb[0].mxu0
  %v301 = vadd.f32 0.0, %v300
  %v302 = vpop.f32.mrb[0].mxu0
  %303 = vmatprep.mubr.f32.mxu0 0.0
  %304 = vmatmul.mubr.f32.gmra.mrb[0].mxu0 %v214
  %v305 = vpop.f32.mrb[0].mxu0
  %v306 = vadd.f32 0.0, %v305
  %v307 = vpop.f32.mrb[0].mxu0
  %308 = vmatprep.mubr.f32.mxu0 0.0
  %309 = vmatmul.mubr.f32.gmra.mrb[0].mxu0 %v217
  %v310 = vpop.f32.mrb[0].mxu0
  %v311 = vadd.f32 0.0, %v310
  %v312 = vpop.f32.mrb[0].mxu0
  %313 = vmatprep.mubr.f32.mxu0 0.0
  %314 = vmatmul.mubr.f32.gmra.mrb[0].mxu0 %v220
  %v315 = vpop.f32.mrb[0].mxu0
  %v316 = vadd.f32 0.0, %v315
  %v317 = vpop.f32.mrb[0].mxu0
  %318 = vmatprep.mubr.f32.mxu0 0.0
  %319 = vmatmul.mubr.f32.gmra.mrb[0].mxu0 %v223
  %v320 = vpop.f32.mrb[0].mxu0
  %v321 = vadd.f32 0.0, %v320
  %v322 = vpop.f32.mrb[0].mxu0
  %323 = vmatprep.mubr.f32.mxu0 0.0
  %324 = vmatmul.mubr.f32.gmra.mrb[0].mxu0 %v226
  %v325 = vpop.f32.mrb[0].mxu0
  %v326 = vadd.f32 0.0, %v325
  %v327 = vpop.f32.mrb[0].mxu0
  %328 = vmatprep.mubr.f32.mxu0 0.0
  %329 = vmatmul.mubr.f32.gmra.mrb[0].mxu0 %v229
  %v330 = vpop.f32.mrb[0].mxu0
  %v331 = vadd.f32 0.0, %v330
  %v332 = vpop.f32.mrb[0].mxu0
  %333 = vmatprep.mubr.f32.mxu0 0.0
  %334 = vmatmul.mubr.f32.gmra.mrb[0].mxu0 %v232
  %v335 = vpop.f32.mrb[0].mxu0
  %v336 = vadd.f32 0.0, %v335
  %v337 = vpop.f32.mrb[0].mxu0
  %338 = vdwg.mxu0
  %vm339 = vcmask 195584
  %v341 = vsel %vm339, %v200, 0
  %v344 = vsel %vm339, %v201, 0
  %v347 = vsel %vm339, %v202, 0
  %v350 = vsel %vm339, %v203, 0
  %v353 = vsel %vm339, %v204, 0
  %v356 = vsel %vm339, %v205, 0
  %v359 = vsel %vm339, %v206, 0
  %v362 = vsel %vm339, %v207, 0
  %v365 = vsel %vm339, %v208, 0
  %367 = vmatprep.subr.mxu0 0.0
  %368 = vmatpush1.msra.mxu0 %v102
  %369 = vmatprep.subr.mxu0 0.0
  %370 = vmatpush1.msra.mxu0 %v103
  %371 = vmatprep.subr.mxu0 0.0
  %372 = vmatpush1.msra.mxu0 %v104
  %373 = vmatprep.subr.mxu0 0.0
  %374 = vmatpush1.msra.mxu0 0.0
  %375 = vmatprep.subr.mxu0 0.0
  %376 = vmatpush1.msra.mxu0 0.0
  %377 = vmatprep.subr.mxu0 0.0
  %378 = vmatpush1.msra.mxu0 0.0
  %379 = vmatprep.subr.mxu0 0.0
  %380 = vmatpush1.msra.mxu0 0.0
  %381 = vmatprep.subr.mxu0 0.0
  %382 = vmatpush1.msra.mxu0 0.0
  %383 = vmatprep.subr.mxu0 0.0
  %384 = vmatpush1.msra.mxu0 0.0
  %385 = vmatprep.subr.mxu0 0.0
  %386 = vmatpush1.msra.mxu0 0.0
  %387 = vmatprep.subr.mxu0 0.0
  %388 = vmatpush1.msra.mxu0 0.0
  %389 = vmatprep.subr.mxu0 0.0
  %390 = vmatpush1.msra.mxu0 0.0
  %391 = vmatprep.subr.mxu0 0.0
  %392 = vmatpush1.msra.mxu0 0.0
  %393 = vmatprep.subr.mxu0 0.0
  %394 = vmatpush1.msra.mxu0 0.0
  %395 = vmatprep.subr.mxu0 0.0
  %396 = vmatpush1.msra.mxu0 0.0
  %397 = vmatprep.subr.mxu0 0.0
  %398 = vmatpush1.msra.mxu0 0.0
  %399 = vmatprep.subr.mxu0 0.0
  %400 = vmatpush1.msra.mxu0 0.0
  %401 = vmatprep.subr.mxu0 0.0
  %402 = vmatpush1.msra.mxu0 0.0
  %403 = vmatprep.subr.mxu0 0.0
  %404 = vmatpush1.msra.mxu0 0.0
  %405 = vmatprep.subr.mxu0 0.0
  %406 = vmatpush1.msra.mxu0 0.0
  %407 = vmatprep.subr.mxu0 0.0
  %408 = vmatpush1.msra.mxu0 0.0
  %409 = vmatprep.subr.mxu0 0.0
  %410 = vmatpush1.msra.mxu0 0.0
  %411 = vmatprep.subr.mxu0 0.0
  %412 = vmatpush1.msra.mxu0 0.0
  %413 = vmatprep.subr.mxu0 0.0
  %414 = vmatpush1.msra.mxu0 0.0
  %415 = vmatprep.subr.mxu0 0.0
  %416 = vmatpush1.msra.mxu0 0.0
  %417 = vmatprep.subr.mxu0 0.0
  %418 = vmatpush1.msra.mxu0 0.0
  %419 = vmatprep.subr.mxu0 0.0
  %420 = vmatpush1.msra.mxu0 0.0
  %421 = vmatprep.subr.mxu0 0.0
  %422 = vmatpush1.msra.mxu0 0.0
  %423 = vmatprep.subr.mxu0 0.0
  %424 = vmatpush1.msra.mxu0 0.0
  %425 = vmatprep.subr.mxu0 0.0
  %426 = vmatpush1.msra.mxu0 0.0
  %427 = vmatprep.subr.mxu0 0.0
  %428 = vmatpush1.msra.mxu0 0.0
  %429 = vmatprep.subr.mxu0 0.0
  %430 = vmatpush1.msra.mxu0 0.0
  %431 = vmatprep.mubr.f32.mxu0 0.0
  %432 = vmatmul.mubr.f32.gmra.mrb[0].mxu0 %v341
  %v433 = vpop.f32.mrb[0].mxu0
  %v434 = vadd.f32 0.0, %v433
  %v435 = vpop.f32.mrb[0].mxu0
  %436 = vmatprep.mubr.f32.mxu0 0.0
  %437 = vmatmul.mubr.f32.gmra.mrb[0].mxu0 %v344
  %v438 = vpop.f32.mrb[0].mxu0
  %v439 = vadd.f32 0.0, %v438
  %v440 = vpop.f32.mrb[0].mxu0
  %441 = vmatprep.mubr.f32.mxu0 0.0
  %442 = vmatmul.mubr.f32.gmra.mrb[0].mxu0 %v347
  %v443 = vpop.f32.mrb[0].mxu0
  %v444 = vadd.f32 0.0, %v443
  %v445 = vpop.f32.mrb[0].mxu0
  %446 = vmatprep.mubr.f32.mxu0 0.0
  %447 = vmatmul.mubr.f32.gmra.mrb[0].mxu0 %v350
  %v448 = vpop.f32.mrb[0].mxu0
  %v449 = vadd.f32 0.0, %v448
  %v450 = vpop.f32.mrb[0].mxu0
  %451 = vmatprep.mubr.f32.mxu0 0.0
  %452 = vmatmul.mubr.f32.gmra.mrb[0].mxu0 %v353
  %v453 = vpop.f32.mrb[0].mxu0
  %v454 = vadd.f32 0.0, %v453
  %v455 = vpop.f32.mrb[0].mxu0
  %456 = vmatprep.mubr.f32.mxu0 0.0
  %457 = vmatmul.mubr.f32.gmra.mrb[0].mxu0 %v356
  %v458 = vpop.f32.mrb[0].mxu0
  %v459 = vadd.f32 0.0, %v458
  %v460 = vpop.f32.mrb[0].mxu0
  %461 = vmatprep.mubr.f32.mxu0 0.0
  %462 = vmatmul.mubr.f32.gmra.mrb[0].mxu0 %v359
  %v463 = vpop.f32.mrb[0].mxu0
  %v464 = vadd.f32 0.0, %v463
  %v465 = vpop.f32.mrb[0].mxu0
  %466 = vmatprep.mubr.f32.mxu0 0.0
  %467 = vmatmul.mubr.f32.gmra.mrb[0].mxu0 %v362
  %v468 = vpop.f32.mrb[0].mxu0
  %v469 = vadd.f32 0.0, %v468
  %v470 = vpop.f32.mrb[0].mxu0
  %471 = vmatprep.mubr.f32.mxu0 0.0
  %472 = vmatmul.mubr.f32.gmra.mrb[0].mxu0 %v365
  %v473 = vpop.f32.mrb[0].mxu0
  %v474 = vadd.f32 0.0, %v473
  %v475 = vpop.f32.mrb[0].mxu0
  %476 = vdwg.mxu0
  %v477 = vld [vmem:[%s2] sm:$0xff]
  %v478 = vld [vmem:[%s2 + $0x10] sm:$0xff]
  %v479 = vld [vmem:[%s2 + $0x20] sm:$0xff]
  %v480 = vld [vmem:[%s2 + $0x30] sm:$0xff]
  %v481 = vld [vmem:[%s2 + $0x8] sm:$0xff]
  %v482 = vld [vmem:[%s2 + $0x18] sm:$0xff]
  %v483 = vld [vmem:[%s2 + $0x28] sm:$0xff]
  %v484 = vld [vmem:[%s2 + $0x38] sm:$0xff]
  %v485 = vld [vmem:[%s3] sm:$0xff]
  %v486 = vld [vmem:[%s3 + $0x8] sm:$0xff]
  %v487 = vld [vmem:[%s3 + $0x10] sm:$0xff]
  %v488 = vld [vmem:[%s3 + $0x18] sm:$0xff]
  %v489 = vld [vmem:[%s3 + $0x20] sm:$0xff]
  %v490 = vld [vmem:[%s3 + $0x28] sm:$0xff]
  %v491 = vld [vmem:[%s3 + $0x30] sm:$0xff]
  %v492 = vld [vmem:[%s3 + $0x38] sm:$0xff]
  %v493 = vld [vmem:[%s3 + $0x40] sm:$0xff]
  %v494 = vld [vmem:[%s3 + $0x48] sm:$0xff]
  %v495 = vld [vmem:[%s3 + $0x50] sm:$0xff]
  %v496 = vld [vmem:[%s3 + $0x58] sm:$0xff]
  %v497 = vld [vmem:[%s3 + $0x60] sm:$0xff]
  %v498 = vld [vmem:[%s3 + $0x68] sm:$0xff]
  %v499 = vld [vmem:[%s3 + $0x70] sm:$0xff]
  %v500 = vld [vmem:[%s3 + $0x78] sm:$0xff]
  %v501 = vld [vmem:[%s3 + $0x80] sm:$0xff]
  %v502 = vld [vmem:[%s3 + $0x88] sm:$0xff]
  %v503 = vld [vmem:[%s3 + $0x90] sm:$0xff]
  %v504 = vld [vmem:[%s3 + $0x98] sm:$0xff]
  %v505 = vld [vmem:[%s3 + $0xa0] sm:$0xff]
  %v506 = vld [vmem:[%s3 + $0xa8] sm:$0xff]
  %v507 = vld [vmem:[%s3 + $0xb0] sm:$0xff]
  %v508 = vld [vmem:[%s3 + $0xb8] sm:$0xff]
  %v509 = vld [vmem:[%s3 + $0xc0] sm:$0xff]
  %v510 = vld [vmem:[%s3 + $0xc8] sm:$0xff]
  %v511 = vld [vmem:[%s3 + $0xd0] sm:$0xff]
  %v512 = vld [vmem:[%s3 + $0xd8] sm:$0xff]
  %v513 = vld [vmem:[%s3 + $0xe0] sm:$0xff]
  %v514 = vld [vmem:[%s3 + $0xe8] sm:$0xff]
  %v515 = vld [vmem:[%s3 + $0xf0] sm:$0xff]
  %v516 = vld [vmem:[%s3 + $0xf8] sm:$0xff]
  %v517 = vld [vmem:[%s3 + $0x100] sm:$0xff]
  %v518 = vld [vmem:[%s3 + $0x108] sm:$0xff]
  %v519 = vld [vmem:[%s3 + $0x110] sm:$0xff]
  %v520 = vld [vmem:[%s3 + $0x118] sm:$0xff]
  %v521 = vld [vmem:[%s3 + $0x120] sm:$0xff]
  %v522 = vld [vmem:[%s3 + $0x128] sm:$0xff]
  %v523 = vld [vmem:[%s3 + $0x130] sm:$0xff]
  %v524 = vld [vmem:[%s3 + $0x138] sm:$0xff]
  %v525 = vld [vmem:[%s3 + $0x140] sm:$0xff]
  %v526 = vld [vmem:[%s3 + $0x148] sm:$0xff]
  %v527 = vld [vmem:[%s3 + $0x150] sm:$0xff]
  %v528 = vld [vmem:[%s3 + $0x158] sm:$0xff]
  %v529 = vld [vmem:[%s3 + $0x160] sm:$0xff]
  %v530 = vld [vmem:[%s3 + $0x168] sm:$0xff]
  %v531 = vld [vmem:[%s3 + $0x170] sm:$0xff]
  %v532 = vld [vmem:[%s3 + $0x178] sm:$0xff]
  %v533 = vld [vmem:[%s3 + $0x180] sm:$0xff]
  %v534 = vld [vmem:[%s3 + $0x188] sm:$0xff]
  %v535 = vld [vmem:[%s3 + $0x190] sm:$0xff]
  %v536 = vld [vmem:[%s3 + $0x198] sm:$0xff]
  %v537 = vld [vmem:[%s3 + $0x1a0] sm:$0xff]
  %v538 = vld [vmem:[%s3 + $0x1a8] sm:$0xff]
  %v539 = vld [vmem:[%s3 + $0x1b0] sm:$0xff]
  %v540 = vld [vmem:[%s3 + $0x1b8] sm:$0xff]
  %v541 = vld [vmem:[%s3 + $0x1c0] sm:$0xff]
  %v542 = vld [vmem:[%s3 + $0x1c8] sm:$0xff]
  %v543 = vld [vmem:[%s3 + $0x1d0] sm:$0xff]
  %v544 = vld [vmem:[%s3 + $0x1d8] sm:$0xff]
  %v545 = vld [vmem:[%s3 + $0x1e0] sm:$0xff]
  %v546 = vld [vmem:[%s3 + $0x1e8] sm:$0xff]
  %v547 = vld [vmem:[%s3 + $0x1f0] sm:$0xff]
  %v548 = vld [vmem:[%s3 + $0x1f8] sm:$0xff]
  %v549 = vld [vmem:[%s3 + $0x200] sm:$0xff]
  %v550 = vld [vmem:[%s3 + $0x208] sm:$0xff]
  %v551 = vld [vmem:[%s3 + $0x210] sm:$0xff]
  %v552 = vld [vmem:[%s3 + $0x218] sm:$0xff]
  %v553 = vld [vmem:[%s3 + $0x220] sm:$0xff]
  %v554 = vld [vmem:[%s3 + $0x228] sm:$0xff]
  %v555 = vld [vmem:[%s3 + $0x230] sm:$0xff]
  %v556 = vld [vmem:[%s3 + $0x238] sm:$0xff]
  %v557 = vld [vmem:[%s4] sm:$0x1]
  %v558 = vld [vmem:[%s4 + $0x1] sm:$0x1]
  %v559 = vld [vmem:[%s4 + $0x2] sm:$0x1]
  %v560 = vld [vmem:[%s5] sm:$0xff]
  %v561 = vld [vmem:[%s5 + $0x8] sm:$0xff]
  %v562 = vld [vmem:[%s5 + $0x10] sm:$0xff]
  %v563 = vld [vmem:[%s5 + $0x18] sm:$0xff]
  %v564 = vld [vmem:[%s5 + $0x20] sm:$0xff]
  %v565 = vld [vmem:[%s5 + $0x28] sm:$0xff]
  %v566 = vld [vmem:[%s5 + $0x30] sm:$0xff]
  %v567 = vld [vmem:[%s5 + $0x38] sm:$0xff]
  %v568 = vld [vmem:[%s5 + $0x40] sm:$0xff]
  %v569 = vld [vmem:[%s5 + $0x48] sm:$0xff]
  %v570 = vld [vmem:[%s5 + $0x50] sm:$0xff]
  %v571 = vld [vmem:[%s5 + $0x58] sm:$0xff]
  %v572 = vld [vmem:[%s5 + $0x60] sm:$0xff]
  %v573 = vld [vmem:[%s5 + $0x68] sm:$0xff]
  %v574 = vld [vmem:[%s5 + $0x70] sm:$0xff]
  %v575 = vld [vmem:[%s5 + $0x78] sm:$0xff]
  %v576 = vld [vmem:[%s5 + $0x80] sm:$0xff]
  %v577 = vld [vmem:[%s5 + $0x88] sm:$0xff]
  %v578 = vld [vmem:[%s5 + $0x90] sm:$0xff]
  %v579 = vld [vmem:[%s5 + $0x98] sm:$0xff]
  %v580 = vld [vmem:[%s5 + $0xa0] sm:$0xff]
  %v581 = vld [vmem:[%s5 + $0xa8] sm:$0xff]
  %v582 = vld [vmem:[%s5 + $0xb0] sm:$0xff]
  %v583 = vld [vmem:[%s5 + $0xb8] sm:$0xff]
  %s584 = scalar_lea.vmem %s5, 192
  %v585 = vld [vmem:[%s584] ss:$8 sm:$0xf]
  %v586 = vlaneseq
  %v587 = vshrl.u32 %v586, 7
  %v588 = vsub.s32 0, %v587
  %v589 = vrot.slane %v557, %v588
  %vm590 = vcmask 261120
  %v592 = vsel %vm590, %v301, 0
  %v595 = vsel %vm590, %v306, 0
  %v598 = vsel %vm590, %v311, 0
  %v601 = vsel %vm590, %v316, 0
  %v604 = vsel %vm590, %v321, 0
  %v607 = vsel %vm590, %v326, 0
  %v610 = vsel %vm590, %v331, 0
  %v613 = vsel %vm590, %v336, 0
  %615 = vmatprep.subr.mxu0 0.0
  %616 = vmatpush1.msra.mxu0 %v481
  %617 = vmatprep.subr.mxu0 0.0
  %618 = vmatpush1.msra.mxu0 %v482
  %619 = vmatprep.subr.mxu0 0.0
  %620 = vmatpush1.msra.mxu0 %v483
  %621 = vmatprep.subr.mxu0 0.0
  %622 = vmatpush1.msra.mxu0 %v484
  %623 = vmatprep.subr.mxu0 0.0
  %624 = vmatpush1.msra.mxu0 0.0
  %625 = vmatprep.subr.mxu0 0.0
  %626 = vmatpush1.msra.mxu0 0.0
  %627 = vmatprep.subr.mxu0 0.0
  %628 = vmatpush1.msra.mxu0 0.0
  %629 = vmatprep.subr.mxu0 0.0
  %630 = vmatpush1.msra.mxu0 0.0
  %631 = vmatprep.subr.mxu0 0.0
  %632 = vmatpush1.msra.mxu0 0.0
  %633 = vmatprep.subr.mxu0 0.0
  %634 = vmatpush1.msra.mxu0 0.0
  %635 = vmatprep.subr.mxu0 0.0
  %636 = vmatpush1.msra.mxu0 0.0
  %637 = vmatprep.subr.mxu0 0.0
  %638 = vmatpush1.msra.mxu0 0.0
  %639 = vmatprep.subr.mxu0 0.0
  %640 = vmatpush1.msra.mxu0 0.0
  %641 = vmatprep.subr.mxu0 0.0
  %642 = vmatpush1.msra.mxu0 0.0
  %643 = vmatprep.subr.mxu0 0.0
  %644 = vmatpush1.msra.mxu0 0.0
  %645 = vmatprep.subr.mxu0 0.0
  %646 = vmatpush1.msra.mxu0 0.0
  %647 = vmatprep.subr.mxu0 0.0
  %648 = vmatpush1.msra.mxu0 0.0
  %649 = vmatprep.subr.mxu0 0.0
  %650 = vmatpush1.msra.mxu0 0.0
  %651 = vmatprep.subr.mxu0 0.0
  %652 = vmatpush1.msra.mxu0 0.0
  %653 = vmatprep.subr.mxu0 0.0
  %654 = vmatpush1.msra.mxu0 0.0
  %655 = vmatprep.subr.mxu0 0.0
  %656 = vmatpush1.msra.mxu0 0.0
  %657 = vmatprep.subr.mxu0 0.0
  %658 = vmatpush1.msra.mxu0 0.0
  %659 = vmatprep.subr.mxu0 0.0
  %660 = vmatpush1.msra.mxu0 0.0
  %661 = vmatprep.subr.mxu0 0.0
  %662 = vmatpush1.msra.mxu0 0.0
  %663 = vmatprep.subr.mxu0 0.0
  %664 = vmatpush1.msra.mxu0 0.0
  %665 = vmatprep.subr.mxu0 0.0
  %666 = vmatpush1.msra.mxu0 0.0
  %667 = vmatprep.subr.mxu0 0.0
  %668 = vmatpush1.msra.mxu0 0.0
  %669 = vmatprep.subr.mxu0 0.0
  %670 = vmatpush1.msra.mxu0 0.0
  %671 = vmatprep.subr.mxu0 0.0
  %672 = vmatpush1.msra.mxu0 0.0
  %673 = vmatprep.subr.mxu0 0.0
  %674 = vmatpush1.msra.mxu0 0.0
  %675 = vmatprep.subr.mxu0 0.0
  %676 = vmatpush1.msra.mxu0 0.0
  %677 = vmatprep.subr.mxu0 0.0
  %678 = vmatpush1.msra.mxu0 0.0
  %679 = vmatprep.mubr.f32.mxu0 0.0
  %680 = vmatmul.mubr.f32.gmra.mrb[0].mxu0 %v592
  %v681 = vpop.f32.mrb[0].mxu0
  %v682 = vadd.f32 %v589, %v681
  %v683 = vpop.f32.mrb[0].mxu0
  %684 = vmatprep.mubr.f32.mxu0 0.0
  %685 = vmatmul.mubr.f32.gmra.mrb[0].mxu0 %v595
  %v686 = vpop.f32.mrb[0].mxu0
  %v687 = vadd.f32 %v589, %v686
  %v688 = vpop.f32.mrb[0].mxu0
  %689 = vmatprep.mubr.f32.mxu0 0.0
  %690 = vmatmul.mubr.f32.gmra.mrb[0].mxu0 %v598
  %v691 = vpop.f32.mrb[0].mxu0
  %v692 = vadd.f32 %v589, %v691
  %v693 = vpop.f32.mrb[0].mxu0
  %694 = vmatprep.mubr.f32.mxu0 0.0
  %695 = vmatmul.mubr.f32.gmra.mrb[0].mxu0 %v601
  %v696 = vpop.f32.mrb[0].mxu0
  %v697 = vadd.f32 %v589, %v696
  %v698 = vpop.f32.mrb[0].mxu0
  %699 = vmatprep.mubr.f32.mxu0 0.0
  %700 = vmatmul.mubr.f32.gmra.mrb[0].mxu0 %v604
  %v701 = vpop.f32.mrb[0].mxu0
  %v702 = vadd.f32 %v589, %v701
  %v703 = vpop.f32.mrb[0].mxu0
  %704 = vmatprep.mubr.f32.mxu0 0.0
  %705 = vmatmul.mubr.f32.gmra.mrb[0].mxu0 %v607
  %v706 = vpop.f32.mrb[0].mxu0
  %v707 = vadd.f32 %v589, %v706
  %v708 = vpop.f32.mrb[0].mxu0
  %709 = vmatprep.mubr.f32.mxu0 0.0
  %710 = vmatmul.mubr.f32.gmra.mrb[0].mxu0 %v610
  %v711 = vpop.f32.mrb[0].mxu0
  %v712 = vadd.f32 %v589, %v711
  %v713 = vpop.f32.mrb[0].mxu0
  %714 = vmatprep.mubr.f32.mxu0 0.0
  %715 = vmatmul.mubr.f32.gmra.mrb[0].mxu0 %v613
  %v716 = vpop.f32.mrb[0].mxu0
  %v717 = vadd.f32 %v589, %v716
  %v718 = vpop.f32.mrb[0].mxu0
  %719 = vdwg.mxu0
  %v720 = vxor.u32 %v682, 2147483648
  %v721 = vxor.u32 %v687, 2147483648
  %v722 = vxor.u32 %v692, 2147483648
  %v723 = vxor.u32 %v697, 2147483648
  %v724 = vxor.u32 %v702, 2147483648
  %v725 = vxor.u32 %v707, 2147483648
  %v726 = vxor.u32 %v712, 2147483648
  %v727 = vxor.u32 %v717, 2147483648
  %v728 = vmul.f32 %v720, 1.442695
  %v729 = vpow.pop %v728
  %v730 = vmul.f32 %v721, 1.442695
  %v731 = vpow.pop %v730
  %v732 = vmul.f32 %v722, 1.442695
  %v733 = vpow.pop %v732
  %v734 = vmul.f32 %v723, 1.442695
  %v735 = vpow.pop %v734
  %v736 = vmul.f32 %v724, 1.442695
  %v737 = vpow.pop %v736
  %v738 = vmul.f32 %v725, 1.442695
  %v739 = vpow.pop %v738
  %v740 = vmul.f32 %v726, 1.442695
  %v741 = vpow.pop %v740
  %v742 = vmul.f32 %v727, 1.442695
  %v743 = vpow.pop %v742
  %v744 = vadd.f32 %v729, 1.0
  %v745 = vadd.f32 %v731, 1.0
  %v746 = vadd.f32 %v733, 1.0
  %v747 = vadd.f32 %v735, 1.0
  %v748 = vadd.f32 %v737, 1.0
  %v749 = vadd.f32 %v739, 1.0
  %v750 = vadd.f32 %v741, 1.0
  %v751 = vadd.f32 %v743, 1.0
  %v752 = vrcp.pop %v744
  %v753 = vmul.f32 1.0, %v752
  %v754 = vrcp.pop %v745
  %v755 = vmul.f32 1.0, %v754
  %v756 = vrcp.pop %v746
  %v757 = vmul.f32 1.0, %v756
  %v758 = vrcp.pop %v747
  %v759 = vmul.f32 1.0, %v758
  %v760 = vrcp.pop %v748
  %v761 = vmul.f32 1.0, %v760
  %v762 = vrcp.pop %v749
  %v763 = vmul.f32 1.0, %v762
  %v764 = vrcp.pop %v750
  %v765 = vmul.f32 1.0, %v764
  %v766 = vrcp.pop %v751
  %v767 = vmul.f32 1.0, %v766
  %v768 = vtanh.pop %v682
  %v769 = vtanh.pop %v687
  %v770 = vtanh.pop %v692
  %v771 = vtanh.pop %v697
  %v772 = vtanh.pop %v702
  %v773 = vtanh.pop %v707
  %v774 = vtanh.pop %v712
  %v775 = vtanh.pop %v717
  %780 = vrot.lane.b32.xlu0 %v481, 64
  %v781 = vpop.permute.xlu0 %780
  %782 = vrot.lane.b32.xlu0 %v482, 64
  %v783 = vpop.permute.xlu0 %782
  %784 = vrot.lane.b32.xlu0 %v483, 64
  %v785 = vpop.permute.xlu0 %784
  %786 = vrot.lane.b32.xlu0 %v484, 64
  %v787 = vpop.permute.xlu0 %786
  %v793 = vsel %vm590, %v434, 0
  %v796 = vsel %vm590, %v439, 0
  %v799 = vsel %vm590, %v444, 0
  %v802 = vsel %vm590, %v449, 0
  %v805 = vsel %vm590, %v454, 0
  %v808 = vsel %vm590, %v459, 0
  %v811 = vsel %vm590, %v464, 0
  %v814 = vsel %vm590, %v469, 0
  %v817 = vsel %vm590, %v474, 0
  %819 = vmatprep.subr.mxu0 0.0
  %820 = vmatpush1.msra.mxu0 %v781
  %821 = vmatprep.subr.mxu0 0.0
  %822 = vmatpush1.msra.mxu0 %v783
  %823 = vmatprep.subr.mxu0 0.0
  %824 = vmatpush1.msra.mxu0 %v785
  %825 = vmatprep.subr.mxu0 0.0
  %826 = vmatpush1.msra.mxu0 %v787
  %827 = vmatprep.subr.mxu0 0.0
  %828 = vmatpush1.msra.mxu0 0.0
  %829 = vmatprep.subr.mxu0 0.0
  %830 = vmatpush1.msra.mxu0 0.0
  %831 = vmatprep.subr.mxu0 0.0
  %832 = vmatpush1.msra.mxu0 0.0
  %833 = vmatprep.subr.mxu0 0.0
  %834 = vmatpush1.msra.mxu0 0.0
  %835 = vmatprep.subr.mxu0 0.0
  %836 = vmatpush1.msra.mxu0 0.0
  %837 = vmatprep.subr.mxu0 0.0
  %838 = vmatpush1.msra.mxu0 0.0
  %839 = vmatprep.subr.mxu0 0.0
  %840 = vmatpush1.msra.mxu0 0.0
  %841 = vmatprep.subr.mxu0 0.0
  %842 = vmatpush1.msra.mxu0 0.0
  %843 = vmatprep.subr.mxu0 0.0
  %844 = vmatpush1.msra.mxu0 0.0
  %845 = vmatprep.subr.mxu0 0.0
  %846 = vmatpush1.msra.mxu0 0.0
  %847 = vmatprep.subr.mxu0 0.0
  %848 = vmatpush1.msra.mxu0 0.0
  %849 = vmatprep.subr.mxu0 0.0
  %850 = vmatpush1.msra.mxu0 0.0
  %851 = vmatprep.subr.mxu0 0.0
  %852 = vmatpush1.msra.mxu0 0.0
  %853 = vmatprep.subr.mxu0 0.0
  %854 = vmatpush1.msra.mxu0 0.0
  %855 = vmatprep.subr.mxu0 0.0
  %856 = vmatpush1.msra.mxu0 0.0
  %857 = vmatprep.subr.mxu0 0.0
  %858 = vmatpush1.msra.mxu0 0.0
  %859 = vmatprep.subr.mxu0 0.0
  %860 = vmatpush1.msra.mxu0 0.0
  %861 = vmatprep.subr.mxu0 0.0
  %862 = vmatpush1.msra.mxu0 0.0
  %863 = vmatprep.subr.mxu0 0.0
  %864 = vmatpush1.msra.mxu0 0.0
  %865 = vmatprep.subr.mxu0 0.0
  %866 = vmatpush1.msra.mxu0 0.0
  %867 = vmatprep.subr.mxu0 0.0
  %868 = vmatpush1.msra.mxu0 0.0
  %869 = vmatprep.subr.mxu0 0.0
  %870 = vmatpush1.msra.mxu0 0.0
  %871 = vmatprep.subr.mxu0 0.0
  %872 = vmatpush1.msra.mxu0 0.0
  %873 = vmatprep.subr.mxu0 0.0
  %874 = vmatpush1.msra.mxu0 0.0
  %875 = vmatprep.subr.mxu0 0.0
  %876 = vmatpush1.msra.mxu0 0.0
  %877 = vmatprep.subr.mxu0 0.0
  %878 = vmatpush1.msra.mxu0 0.0
  %879 = vmatprep.subr.mxu0 0.0
  %880 = vmatpush1.msra.mxu0 0.0
  %881 = vmatprep.subr.mxu0 0.0
  %882 = vmatpush1.msra.mxu0 0.0
  %883 = vmatprep.mubr.f32.mxu0 0.0
  %884 = vmatmul.mubr.f32.gmra.mrb[0].mxu0 %v793
  %v885 = vpop.f32.mrb[0].mxu0
  %v886 = vadd.f32 0.0, %v885
  %v887 = vpop.f32.mrb[0].mxu0
  %888 = vmatprep.mubr.f32.mxu0 0.0
  %889 = vmatmul.mubr.f32.gmra.mrb[0].mxu0 %v796
  %v890 = vpop.f32.mrb[0].mxu0
  %v891 = vadd.f32 0.0, %v890
  %v892 = vpop.f32.mrb[0].mxu0
  %893 = vmatprep.mubr.f32.mxu0 0.0
  %894 = vmatmul.mubr.f32.gmra.mrb[0].mxu0 %v799
  %v895 = vpop.f32.mrb[0].mxu0
  %v896 = vadd.f32 0.0, %v895
  %v897 = vpop.f32.mrb[0].mxu0
  %898 = vmatprep.mubr.f32.mxu0 0.0
  %899 = vmatmul.mubr.f32.gmra.mrb[0].mxu0 %v802
  %v900 = vpop.f32.mrb[0].mxu0
  %v901 = vadd.f32 0.0, %v900
  %v902 = vpop.f32.mrb[0].mxu0
  %903 = vmatprep.mubr.f32.mxu0 0.0
  %904 = vmatmul.mubr.f32.gmra.mrb[0].mxu0 %v805
  %v905 = vpop.f32.mrb[0].mxu0
  %v906 = vadd.f32 0.0, %v905
  %v907 = vpop.f32.mrb[0].mxu0
  %908 = vmatprep.mubr.f32.mxu0 0.0
  %909 = vmatmul.mubr.f32.gmra.mrb[0].mxu0 %v808
  %v910 = vpop.f32.mrb[0].mxu0
  %v911 = vadd.f32 0.0, %v910
  %v912 = vpop.f32.mrb[0].mxu0
  %913 = vmatprep.mubr.f32.mxu0 0.0
  %914 = vmatmul.mubr.f32.gmra.mrb[0].mxu0 %v811
  %v915 = vpop.f32.mrb[0].mxu0
  %v916 = vadd.f32 0.0, %v915
  %v917 = vpop.f32.mrb[0].mxu0
  %918 = vmatprep.mubr.f32.mxu0 0.0
  %919 = vmatmul.mubr.f32.gmra.mrb[0].mxu0 %v814
  %v920 = vpop.f32.mrb[0].mxu0
  %v921 = vadd.f32 0.0, %v920
  %v922 = vpop.f32.mrb[0].mxu0
  %923 = vmatprep.mubr.f32.mxu0 0.0
  %924 = vmatmul.mubr.f32.gmra.mrb[0].mxu0 %v817
  %v925 = vpop.f32.mrb[0].mxu0
  %v926 = vadd.f32 0.0, %v925
  %v927 = vpop.f32.mrb[0].mxu0
  %928 = vdwg.mxu0
  %vm929 = vcmask 130048
  %v930 = vsel %vm929, %v886, -inf
  %931 = vmax.xlane.f32.xlu0 %v930
  %v932 = vpop.xlane.xlu0 %931
  %v933 = vsel %vm929, %v891, -inf
  %934 = vmax.xlane.f32.xlu0 %v933
  %v935 = vpop.xlane.xlu0 %934
  %v936 = vsel %vm929, %v896, -inf
  %937 = vmax.xlane.f32.xlu0 %v936
  %v938 = vpop.xlane.xlu0 %937
  %v939 = vsel %vm929, %v901, -inf
  %940 = vmax.xlane.f32.xlu0 %v939
  %v941 = vpop.xlane.xlu0 %940
  %v942 = vsel %vm929, %v906, -inf
  %943 = vmax.xlane.f32.xlu0 %v942
  %v944 = vpop.xlane.xlu0 %943
  %v945 = vsel %vm929, %v911, -inf
  %946 = vmax.xlane.f32.xlu0 %v945
  %v947 = vpop.xlane.xlu0 %946
  %v948 = vsel %vm929, %v916, -inf
  %949 = vmax.xlane.f32.xlu0 %v948
  %v950 = vpop.xlane.xlu0 %949
  %v951 = vsel %vm929, %v921, -inf
  %952 = vmax.xlane.f32.xlu0 %v951
  %v953 = vpop.xlane.xlu0 %952
  %v954 = vsel %vm929, %v926, -inf
  %955 = vmax.xlane.f32.xlu0 %v954
  %v956 = vpop.xlane.xlu0 %955
  %v957 = vsub.f32 %v886, %v932
  %v958 = vsub.f32 %v891, %v935
  %v959 = vsub.f32 %v896, %v938
  %v960 = vsub.f32 %v901, %v941
  %v961 = vsub.f32 %v906, %v944
  %v962 = vsub.f32 %v911, %v947
  %v963 = vsub.f32 %v916, %v950
  %v964 = vsub.f32 %v921, %v953
  %v965 = vsub.f32 %v926, %v956
  %v966 = vmul.f32 %v957, 1.442695
  %v967 = vpow.pop %v966
  %v968 = vmul.f32 %v958, 1.442695
  %v969 = vpow.pop %v968
  %v970 = vmul.f32 %v959, 1.442695
  %v971 = vpow.pop %v970
  %v972 = vmul.f32 %v960, 1.442695
  %v973 = vpow.pop %v972
  %v974 = vmul.f32 %v961, 1.442695
  %v975 = vpow.pop %v974
  %v976 = vmul.f32 %v962, 1.442695
  %v977 = vpow.pop %v976
  %v978 = vmul.f32 %v963, 1.442695
  %v979 = vpow.pop %v978
  %v980 = vmul.f32 %v964, 1.442695
  %v981 = vpow.pop %v980
  %v982 = vmul.f32 %v965, 1.442695
  %v983 = vpow.pop %v982
  %v984 = vsel %vm929, %v967, 0.0
  %985 = vadd.xlane.f32.xlu0 %v984
  %v986 = vpop.xlane.xlu0 %985
  %v987 = vsel %vm929, %v969, 0.0
  %988 = vadd.xlane.f32.xlu0 %v987
  %v989 = vpop.xlane.xlu0 %988
  %v990 = vsel %vm929, %v971, 0.0
  %991 = vadd.xlane.f32.xlu0 %v990
  %v992 = vpop.xlane.xlu0 %991
  %v993 = vsel %vm929, %v973, 0.0
  %994 = vadd.xlane.f32.xlu0 %v993
  %v995 = vpop.xlane.xlu0 %994
  %v996 = vsel %vm929, %v975, 0.0
  %997 = vadd.xlane.f32.xlu0 %v996
  %v998 = vpop.xlane.xlu0 %997
  %v999 = vsel %vm929, %v977, 0.0
  %1000 = vadd.xlane.f32.xlu0 %v999
  %v1001 = vpop.xlane.xlu0 %1000
  %v1002 = vsel %vm929, %v979, 0.0
  %1003 = vadd.xlane.f32.xlu0 %v1002
  %v1004 = vpop.xlane.xlu0 %1003
  %v1005 = vsel %vm929, %v981, 0.0
  %1006 = vadd.xlane.f32.xlu0 %v1005
  %v1007 = vpop.xlane.xlu0 %1006
  %v1008 = vsel %vm929, %v983, 0.0
  %1009 = vadd.xlane.f32.xlu0 %v1008
  %v1010 = vpop.xlane.xlu0 %1009
  %v1011 = vrcp.pop %v986
  %v1012 = vmul.f32 %v967, %v1011
  %v1013 = vrcp.pop %v989
  %v1014 = vmul.f32 %v969, %v1013
  %v1015 = vrcp.pop %v992
  %v1016 = vmul.f32 %v971, %v1015
  %v1017 = vrcp.pop %v995
  %v1018 = vmul.f32 %v973, %v1017
  %v1019 = vrcp.pop %v998
  %v1020 = vmul.f32 %v975, %v1019
  %v1021 = vrcp.pop %v1001
  %v1022 = vmul.f32 %v977, %v1021
  %v1023 = vrcp.pop %v1004
  %v1024 = vmul.f32 %v979, %v1023
  %v1025 = vrcp.pop %v1007
  %v1026 = vmul.f32 %v981, %v1025
  %v1027 = vrcp.pop %v1010
  %v1028 = vmul.f32 %v983, %v1027
  %1037 = vrot.lane.b32.xlu0 %v768, 96
  %v1038 = vpop.permute.xlu0 %1037
  %1039 = vrot.lane.b32.xlu0 %v769, 96
  %v1040 = vpop.permute.xlu0 %1039
  %1041 = vrot.lane.b32.xlu0 %v770, 96
  %v1042 = vpop.permute.xlu0 %1041
  %1043 = vrot.lane.b32.xlu0 %v771, 96
  %v1044 = vpop.permute.xlu0 %1043
  %1045 = vrot.lane.b32.xlu0 %v772, 96
  %v1046 = vpop.permute.xlu0 %1045
  %1047 = vrot.lane.b32.xlu0 %v773, 96
  %v1048 = vpop.permute.xlu0 %1047
  %1049 = vrot.lane.b32.xlu0 %v774, 96
  %v1050 = vpop.permute.xlu0 %1049
  %1051 = vrot.lane.b32.xlu0 %v775, 96
  %v1052 = vpop.permute.xlu0 %1051
  %v1054 = vsel %vm590, %v753, 0
  %v1057 = vsel %vm590, %v755, 0
  %v1060 = vsel %vm590, %v757, 0
  %v1063 = vsel %vm590, %v759, 0
  %v1066 = vsel %vm590, %v761, 0
  %v1069 = vsel %vm590, %v763, 0
  %v1072 = vsel %vm590, %v765, 0
  %v1075 = vsel %vm590, %v767, 0
  %v1077 = vsel %vm590, %v1038, 0
  %v1079 = vsel %vm590, %v1040, 0
  %v1081 = vsel %vm590, %v1042, 0
  %v1083 = vsel %vm590, %v1044, 0
  %v1085 = vsel %vm590, %v1046, 0
  %v1087 = vsel %vm590, %v1048, 0
  %v1089 = vsel %vm590, %v1050, 0
  %v1091 = vsel %vm590, %v1052, 0
  %1093 = vmatprep.subr.mxu0 %v561
  %1094 = vmatpush1.msra.mxu0 %v560
  %1095 = vmatprep.subr.mxu0 %v565
  %1096 = vmatpush1.msra.mxu0 %v564
  %1097 = vmatprep.subr.mxu0 %v569
  %1098 = vmatpush1.msra.mxu0 %v568
  %1099 = vmatprep.subr.mxu0 %v573
  %1100 = vmatpush1.msra.mxu0 %v572
  %1101 = vmatprep.subr.mxu0 0.0
  %1102 = vmatpush1.msra.mxu0 0.0
  %1103 = vmatprep.subr.mxu0 0.0
  %1104 = vmatpush1.msra.mxu0 0.0
  %1105 = vmatprep.subr.mxu0 0.0
  %1106 = vmatpush1.msra.mxu0 0.0
  %1107 = vmatprep.subr.mxu0 0.0
  %1108 = vmatpush1.msra.mxu0 0.0
  %1109 = vmatprep.subr.mxu0 0.0
  %1110 = vmatpush1.msra.mxu0 0.0
  %1111 = vmatprep.subr.mxu0 0.0
  %1112 = vmatpush1.msra.mxu0 0.0
  %1113 = vmatprep.subr.mxu0 0.0
  %1114 = vmatpush1.msra.mxu0 0.0
  %1115 = vmatprep.subr.mxu0 0.0
  %1116 = vmatpush1.msra.mxu0 0.0
  %1117 = vmatprep.subr.mxu0 0.0
  %1118 = vmatpush1.msra.mxu0 0.0
  %1119 = vmatprep.subr.mxu0 0.0
  %1120 = vmatpush1.msra.mxu0 0.0
  %1121 = vmatprep.subr.mxu0 0.0
  %1122 = vmatpush1.msra.mxu0 0.0
  %1123 = vmatprep.subr.mxu0 0.0
  %1124 = vmatpush1.msra.mxu0 0.0
  %1125 = vmatprep.subr.mxu0 0.0
  %1126 = vmatpush1.msra.mxu0 0.0
  %1127 = vmatprep.subr.mxu0 0.0
  %1128 = vmatpush1.msra.mxu0 0.0
  %1129 = vmatprep.subr.mxu0 0.0
  %1130 = vmatpush1.msra.mxu0 0.0
  %1131 = vmatprep.subr.mxu0 0.0
  %1132 = vmatpush1.msra.mxu0 0.0
  %1133 = vmatprep.subr.mxu0 0.0
  %1134 = vmatpush1.msra.mxu0 0.0
  %1135 = vmatprep.subr.mxu0 0.0
  %1136 = vmatpush1.msra.mxu0 0.0
  %1137 = vmatprep.subr.mxu0 0.0
  %1138 = vmatpush1.msra.mxu0 0.0
  %1139 = vmatprep.subr.mxu0 0.0
  %1140 = vmatpush1.msra.mxu0 0.0
  %1141 = vmatprep.subr.mxu0 0.0
  %1142 = vmatpush1.msra.mxu0 0.0
  %1143 = vmatprep.subr.mxu0 0.0
  %1144 = vmatpush1.msra.mxu0 0.0
  %1145 = vmatprep.subr.mxu0 0.0
  %1146 = vmatpush1.msra.mxu0 0.0
  %1147 = vmatprep.subr.mxu0 0.0
  %1148 = vmatpush1.msra.mxu0 0.0
  %1149 = vmatprep.subr.mxu0 0.0
  %1150 = vmatpush1.msra.mxu0 0.0
  %1151 = vmatprep.subr.mxu0 0.0
  %1152 = vmatpush1.msra.mxu0 0.0
  %1153 = vmatprep.subr.mxu0 0.0
  %1154 = vmatpush1.msra.mxu0 0.0
  %1155 = vmatprep.subr.mxu0 0.0
  %1156 = vmatpush1.msra.mxu0 0.0
  %1157 = vmatprep.mubr.f32.mxu0 0.0
  %1158 = vmatmul.mubr.f32.gmra.mrb[0].mxu0 %v1054
  %v1159 = vpop.f32.mrb[0].mxu0
  %v1160 = vadd.f32 0.0, %v1159
  %v1161 = vpop.f32.mrb[0].mxu0
  %v1162 = vadd.f32 0.0, %v1161
  %1163 = vmatprep.mubr.f32.mxu0 0.0
  %1164 = vmatmul.mubr.f32.gmra.mrb[0].mxu0 %v1057
  %v1165 = vpop.f32.mrb[0].mxu0
  %v1166 = vadd.f32 0.0, %v1165
  %v1167 = vpop.f32.mrb[0].mxu0
  %v1168 = vadd.f32 0.0, %v1167
  %1169 = vmatprep.mubr.f32.mxu0 0.0
  %1170 = vmatmul.mubr.f32.gmra.mrb[0].mxu0 %v1060
  %v1171 = vpop.f32.mrb[0].mxu0
  %v1172 = vadd.f32 0.0, %v1171
  %v1173 = vpop.f32.mrb[0].mxu0
  %v1174 = vadd.f32 0.0, %v1173
  %1175 = vmatprep.mubr.f32.mxu0 0.0
  %1176 = vmatmul.mubr.f32.gmra.mrb[0].mxu0 %v1063
  %v1177 = vpop.f32.mrb[0].mxu0
  %v1178 = vadd.f32 0.0, %v1177
  %v1179 = vpop.f32.mrb[0].mxu0
  %v1180 = vadd.f32 0.0, %v1179
  %1181 = vmatprep.mubr.f32.mxu0 0.0
  %1182 = vmatmul.mubr.f32.gmra.mrb[0].mxu0 %v1066
  %v1183 = vpop.f32.mrb[0].mxu0
  %v1184 = vadd.f32 0.0, %v1183
  %v1185 = vpop.f32.mrb[0].mxu0
  %v1186 = vadd.f32 0.0, %v1185
  %1187 = vmatprep.mubr.f32.mxu0 0.0
  %1188 = vmatmul.mubr.f32.gmra.mrb[0].mxu0 %v1069
  %v1189 = vpop.f32.mrb[0].mxu0
  %v1190 = vadd.f32 0.0, %v1189
  %v1191 = vpop.f32.mrb[0].mxu0
  %v1192 = vadd.f32 0.0, %v1191
  %1193 = vmatprep.mubr.f32.mxu0 0.0
  %1194 = vmatmul.mubr.f32.gmra.mrb[0].mxu0 %v1072
  %v1195 = vpop.f32.mrb[0].mxu0
  %v1196 = vadd.f32 0.0, %v1195
  %v1197 = vpop.f32.mrb[0].mxu0
  %v1198 = vadd.f32 0.0, %v1197
  %1199 = vmatprep.mubr.f32.mxu0 0.0
  %1200 = vmatmul.mubr.f32.gmra.mrb[0].mxu0 %v1075
  %v1201 = vpop.f32.mrb[0].mxu0
  %v1202 = vadd.f32 0.0, %v1201
  %v1203 = vpop.f32.mrb[0].mxu0
  %v1204 = vadd.f32 0.0, %v1203
  %1205 = vmatprep.mubr.f32.mxu0 0.0
  %1206 = vmatmul.mubr.f32.gmra.mrb[0].mxu0 %v1077
  %v1207 = vpop.f32.mrb[0].mxu0
  %v1208 = vadd.f32 0.0, %v1207
  %v1209 = vpop.f32.mrb[0].mxu0
  %v1210 = vadd.f32 0.0, %v1209
  %1211 = vmatprep.mubr.f32.mxu0 0.0
  %1212 = vmatmul.mubr.f32.gmra.mrb[0].mxu0 %v1079
  %v1213 = vpop.f32.mrb[0].mxu0
  %v1214 = vadd.f32 0.0, %v1213
  %v1215 = vpop.f32.mrb[0].mxu0
  %v1216 = vadd.f32 0.0, %v1215
  %1217 = vmatprep.mubr.f32.mxu0 0.0
  %1218 = vmatmul.mubr.f32.gmra.mrb[0].mxu0 %v1081
  %v1219 = vpop.f32.mrb[0].mxu0
  %v1220 = vadd.f32 0.0, %v1219
  %v1221 = vpop.f32.mrb[0].mxu0
  %v1222 = vadd.f32 0.0, %v1221
  %1223 = vmatprep.mubr.f32.mxu0 0.0
  %1224 = vmatmul.mubr.f32.gmra.mrb[0].mxu0 %v1083
  %v1225 = vpop.f32.mrb[0].mxu0
  %v1226 = vadd.f32 0.0, %v1225
  %v1227 = vpop.f32.mrb[0].mxu0
  %v1228 = vadd.f32 0.0, %v1227
  %1229 = vmatprep.mubr.f32.mxu0 0.0
  %1230 = vmatmul.mubr.f32.gmra.mrb[0].mxu0 %v1085
  %v1231 = vpop.f32.mrb[0].mxu0
  %v1232 = vadd.f32 0.0, %v1231
  %v1233 = vpop.f32.mrb[0].mxu0
  %v1234 = vadd.f32 0.0, %v1233
  %1235 = vmatprep.mubr.f32.mxu0 0.0
  %1236 = vmatmul.mubr.f32.gmra.mrb[0].mxu0 %v1087
  %v1237 = vpop.f32.mrb[0].mxu0
  %v1238 = vadd.f32 0.0, %v1237
  %v1239 = vpop.f32.mrb[0].mxu0
  %v1240 = vadd.f32 0.0, %v1239
  %1241 = vmatprep.mubr.f32.mxu0 0.0
  %1242 = vmatmul.mubr.f32.gmra.mrb[0].mxu0 %v1089
  %v1243 = vpop.f32.mrb[0].mxu0
  %v1244 = vadd.f32 0.0, %v1243
  %v1245 = vpop.f32.mrb[0].mxu0
  %v1246 = vadd.f32 0.0, %v1245
  %1247 = vmatprep.mubr.f32.mxu0 0.0
  %1248 = vmatmul.mubr.f32.gmra.mrb[0].mxu0 %v1091
  %v1249 = vpop.f32.mrb[0].mxu0
  %v1250 = vadd.f32 0.0, %v1249
  %v1251 = vpop.f32.mrb[0].mxu0
  %v1252 = vadd.f32 0.0, %v1251
  %1253 = vdwg.mxu0
  %1254 = vmatprep.subr.mxu0 %v563
  %1255 = vmatpush1.msra.mxu0 %v562
  %1256 = vmatprep.subr.mxu0 %v567
  %1257 = vmatpush1.msra.mxu0 %v566
  %1258 = vmatprep.subr.mxu0 %v571
  %1259 = vmatpush1.msra.mxu0 %v570
  %1260 = vmatprep.subr.mxu0 %v575
  %1261 = vmatpush1.msra.mxu0 %v574
  %1262 = vmatprep.subr.mxu0 0.0
  %1263 = vmatpush1.msra.mxu0 0.0
  %1264 = vmatprep.subr.mxu0 0.0
  %1265 = vmatpush1.msra.mxu0 0.0
  %1266 = vmatprep.subr.mxu0 0.0
  %1267 = vmatpush1.msra.mxu0 0.0
  %1268 = vmatprep.subr.mxu0 0.0
  %1269 = vmatpush1.msra.mxu0 0.0
  %1270 = vmatprep.subr.mxu0 0.0
  %1271 = vmatpush1.msra.mxu0 0.0
  %1272 = vmatprep.subr.mxu0 0.0
  %1273 = vmatpush1.msra.mxu0 0.0
  %1274 = vmatprep.subr.mxu0 0.0
  %1275 = vmatpush1.msra.mxu0 0.0
  %1276 = vmatprep.subr.mxu0 0.0
  %1277 = vmatpush1.msra.mxu0 0.0
  %1278 = vmatprep.subr.mxu0 0.0
  %1279 = vmatpush1.msra.mxu0 0.0
  %1280 = vmatprep.subr.mxu0 0.0
  %1281 = vmatpush1.msra.mxu0 0.0
  %1282 = vmatprep.subr.mxu0 0.0
  %1283 = vmatpush1.msra.mxu0 0.0
  %1284 = vmatprep.subr.mxu0 0.0
  %1285 = vmatpush1.msra.mxu0 0.0
  %1286 = vmatprep.subr.mxu0 0.0
  %1287 = vmatpush1.msra.mxu0 0.0
  %1288 = vmatprep.subr.mxu0 0.0
  %1289 = vmatpush1.msra.mxu0 0.0
  %1290 = vmatprep.subr.mxu0 0.0
  %1291 = vmatpush1.msra.mxu0 0.0
  %1292 = vmatprep.subr.mxu0 0.0
  %1293 = vmatpush1.msra.mxu0 0.0
  %1294 = vmatprep.subr.mxu0 0.0
  %1295 = vmatpush1.msra.mxu0 0.0
  %1296 = vmatprep.subr.mxu0 0.0
  %1297 = vmatpush1.msra.mxu0 0.0
  %1298 = vmatprep.subr.mxu0 0.0
  %1299 = vmatpush1.msra.mxu0 0.0
  %1300 = vmatprep.subr.mxu0 0.0
  %1301 = vmatpush1.msra.mxu0 0.0
  %1302 = vmatprep.subr.mxu0 0.0
  %1303 = vmatpush1.msra.mxu0 0.0
  %1304 = vmatprep.subr.mxu0 0.0
  %1305 = vmatpush1.msra.mxu0 0.0
  %1306 = vmatprep.subr.mxu0 0.0
  %1307 = vmatpush1.msra.mxu0 0.0
  %1308 = vmatprep.subr.mxu0 0.0
  %1309 = vmatpush1.msra.mxu0 0.0
  %1310 = vmatprep.subr.mxu0 0.0
  %1311 = vmatpush1.msra.mxu0 0.0
  %1312 = vmatprep.subr.mxu0 0.0
  %1313 = vmatpush1.msra.mxu0 0.0
  %1314 = vmatprep.subr.mxu0 0.0
  %1315 = vmatpush1.msra.mxu0 0.0
  %1316 = vmatprep.subr.mxu0 0.0
  %1317 = vmatpush1.msra.mxu0 0.0
  %1318 = vmatprep.mubr.f32.mxu0 0.0
  %1319 = vmatmul.mubr.f32.gmra.mrb[0].mxu0 %v1054
  %v1320 = vpop.f32.mrb[0].mxu0
  %v1321 = vadd.f32 0.0, %v1320
  %v1322 = vpop.f32.mrb[0].mxu0
  %v1323 = vadd.f32 0.0, %v1322
  %1324 = vmatprep.mubr.f32.mxu0 0.0
  %1325 = vmatmul.mubr.f32.gmra.mrb[0].mxu0 %v1057
  %v1326 = vpop.f32.mrb[0].mxu0
  %v1327 = vadd.f32 0.0, %v1326
  %v1328 = vpop.f32.mrb[0].mxu0
  %v1329 = vadd.f32 0.0, %v1328
  %1330 = vmatprep.mubr.f32.mxu0 0.0
  %1331 = vmatmul.mubr.f32.gmra.mrb[0].mxu0 %v1060
  %v1332 = vpop.f32.mrb[0].mxu0
  %v1333 = vadd.f32 0.0, %v1332
  %v1334 = vpop.f32.mrb[0].mxu0
  %v1335 = vadd.f32 0.0, %v1334
  %1336 = vmatprep.mubr.f32.mxu0 0.0
  %1337 = vmatmul.mubr.f32.gmra.mrb[0].mxu0 %v1063
  %v1338 = vpop.f32.mrb[0].mxu0
  %v1339 = vadd.f32 0.0, %v1338
  %v1340 = vpop.f32.mrb[0].mxu0
  %v1341 = vadd.f32 0.0, %v1340
  %1342 = vmatprep.mubr.f32.mxu0 0.0
  %1343 = vmatmul.mubr.f32.gmra.mrb[0].mxu0 %v1066
  %v1344 = vpop.f32.mrb[0].mxu0
  %v1345 = vadd.f32 0.0, %v1344
  %v1346 = vpop.f32.mrb[0].mxu0
  %v1347 = vadd.f32 0.0, %v1346
  %1348 = vmatprep.mubr.f32.mxu0 0.0
  %1349 = vmatmul.mubr.f32.gmra.mrb[0].mxu0 %v1069
  %v1350 = vpop.f32.mrb[0].mxu0
  %v1351 = vadd.f32 0.0, %v1350
  %v1352 = vpop.f32.mrb[0].mxu0
  %v1353 = vadd.f32 0.0, %v1352
  %1354 = vmatprep.mubr.f32.mxu0 0.0
  %1355 = vmatmul.mubr.f32.gmra.mrb[0].mxu0 %v1072
  %v1356 = vpop.f32.mrb[0].mxu0
  %v1357 = vadd.f32 0.0, %v1356
  %v1358 = vpop.f32.mrb[0].mxu0
  %v1359 = vadd.f32 0.0, %v1358
  %1360 = vmatprep.mubr.f32.mxu0 0.0
  %1361 = vmatmul.mubr.f32.gmra.mrb[0].mxu0 %v1075
  %v1362 = vpop.f32.mrb[0].mxu0
  %v1363 = vadd.f32 0.0, %v1362
  %v1364 = vpop.f32.mrb[0].mxu0
  %v1365 = vadd.f32 0.0, %v1364
  %1366 = vmatprep.mubr.f32.mxu0 0.0
  %1367 = vmatmul.mubr.f32.gmra.mrb[0].mxu0 %v1077
  %v1368 = vpop.f32.mrb[0].mxu0
  %v1369 = vadd.f32 0.0, %v1368
  %v1370 = vpop.f32.mrb[0].mxu0
  %v1371 = vadd.f32 0.0, %v1370
  %1372 = vmatprep.mubr.f32.mxu0 0.0
  %1373 = vmatmul.mubr.f32.gmra.mrb[0].mxu0 %v1079
  %v1374 = vpop.f32.mrb[0].mxu0
  %v1375 = vadd.f32 0.0, %v1374
  %v1376 = vpop.f32.mrb[0].mxu0
  %v1377 = vadd.f32 0.0, %v1376
  %1378 = vmatprep.mubr.f32.mxu0 0.0
  %1379 = vmatmul.mubr.f32.gmra.mrb[0].mxu0 %v1081
  %v1380 = vpop.f32.mrb[0].mxu0
  %v1381 = vadd.f32 0.0, %v1380
  %v1382 = vpop.f32.mrb[0].mxu0
  %v1383 = vadd.f32 0.0, %v1382
  %1384 = vmatprep.mubr.f32.mxu0 0.0
  %1385 = vmatmul.mubr.f32.gmra.mrb[0].mxu0 %v1083
  %v1386 = vpop.f32.mrb[0].mxu0
  %v1387 = vadd.f32 0.0, %v1386
  %v1388 = vpop.f32.mrb[0].mxu0
  %v1389 = vadd.f32 0.0, %v1388
  %1390 = vmatprep.mubr.f32.mxu0 0.0
  %1391 = vmatmul.mubr.f32.gmra.mrb[0].mxu0 %v1085
  %v1392 = vpop.f32.mrb[0].mxu0
  %v1393 = vadd.f32 0.0, %v1392
  %v1394 = vpop.f32.mrb[0].mxu0
  %v1395 = vadd.f32 0.0, %v1394
  %1396 = vmatprep.mubr.f32.mxu0 0.0
  %1397 = vmatmul.mubr.f32.gmra.mrb[0].mxu0 %v1087
  %v1398 = vpop.f32.mrb[0].mxu0
  %v1399 = vadd.f32 0.0, %v1398
  %v1400 = vpop.f32.mrb[0].mxu0
  %v1401 = vadd.f32 0.0, %v1400
  %1402 = vmatprep.mubr.f32.mxu0 0.0
  %1403 = vmatmul.mubr.f32.gmra.mrb[0].mxu0 %v1089
  %v1404 = vpop.f32.mrb[0].mxu0
  %v1405 = vadd.f32 0.0, %v1404
  %v1406 = vpop.f32.mrb[0].mxu0
  %v1407 = vadd.f32 0.0, %v1406
  %1408 = vmatprep.mubr.f32.mxu0 0.0
  %1409 = vmatmul.mubr.f32.gmra.mrb[0].mxu0 %v1091
  %v1410 = vpop.f32.mrb[0].mxu0
  %v1411 = vadd.f32 0.0, %v1410
  %v1412 = vpop.f32.mrb[0].mxu0
  %v1413 = vadd.f32 0.0, %v1412
  %1414 = vdwg.mxu0
  %v1416 = vsel %vm929, %v1012, 0
  %v1419 = vsel %vm929, %v1014, 0
  %v1422 = vsel %vm929, %v1016, 0
  %v1425 = vsel %vm929, %v1018, 0
  %v1428 = vsel %vm929, %v1020, 0
  %v1431 = vsel %vm929, %v1022, 0
  %v1434 = vsel %vm929, %v1024, 0
  %v1437 = vsel %vm929, %v1026, 0
  %v1440 = vsel %vm929, %v1028, 0
  %1442 = vmatprep.subr.mxu0 %v577
  %1443 = vmatpush1.msra.mxu0 %v576
  %1444 = vmatprep.subr.mxu0 %v581
  %1445 = vmatpush1.msra.mxu0 %v580
  %1446 = vmatprep.subr.mxu0 0.0
  %1447 = vmatpush1.msra.mxu0 0.0
  %1448 = vmatprep.subr.mxu0 0.0
  %1449 = vmatpush1.msra.mxu0 0.0
  %1450 = vmatprep.subr.mxu0 0.0
  %1451 = vmatpush1.msra.mxu0 0.0
  %1452 = vmatprep.subr.mxu0 0.0
  %1453 = vmatpush1.msra.mxu0 0.0
  %1454 = vmatprep.subr.mxu0 0.0
  %1455 = vmatpush1.msra.mxu0 0.0
  %1456 = vmatprep.subr.mxu0 0.0
  %1457 = vmatpush1.msra.mxu0 0.0
  %1458 = vmatprep.subr.mxu0 0.0
  %1459 = vmatpush1.msra.mxu0 0.0
  %1460 = vmatprep.subr.mxu0 0.0
  %1461 = vmatpush1.msra.mxu0 0.0
  %1462 = vmatprep.subr.mxu0 0.0
  %1463 = vmatpush1.msra.mxu0 0.0
  %1464 = vmatprep.subr.mxu0 0.0
  %1465 = vmatpush1.msra.mxu0 0.0
  %1466 = vmatprep.subr.mxu0 0.0
  %1467 = vmatpush1.msra.mxu0 0.0
  %1468 = vmatprep.subr.mxu0 0.0
  %1469 = vmatpush1.msra.mxu0 0.0
  %1470 = vmatprep.subr.mxu0 0.0
  %1471 = vmatpush1.msra.mxu0 0.0
  %1472 = vmatprep.subr.mxu0 0.0
  %1473 = vmatpush1.msra.mxu0 0.0
  %1474 = vmatprep.subr.mxu0 0.0
  %1475 = vmatpush1.msra.mxu0 0.0
  %1476 = vmatprep.subr.mxu0 0.0
  %1477 = vmatpush1.msra.mxu0 0.0
  %1478 = vmatprep.subr.mxu0 0.0
  %1479 = vmatpush1.msra.mxu0 0.0
  %1480 = vmatprep.subr.mxu0 0.0
  %1481 = vmatpush1.msra.mxu0 0.0
  %1482 = vmatprep.subr.mxu0 0.0
  %1483 = vmatpush1.msra.mxu0 0.0
  %1484 = vmatprep.subr.mxu0 0.0
  %1485 = vmatpush1.msra.mxu0 0.0
  %1486 = vmatprep.subr.mxu0 0.0
  %1487 = vmatpush1.msra.mxu0 0.0
  %1488 = vmatprep.subr.mxu0 0.0
  %1489 = vmatpush1.msra.mxu0 0.0
  %1490 = vmatprep.subr.mxu0 0.0
  %1491 = vmatpush1.msra.mxu0 0.0
  %1492 = vmatprep.subr.mxu0 0.0
  %1493 = vmatpush1.msra.mxu0 0.0
  %1494 = vmatprep.subr.mxu0 0.0
  %1495 = vmatpush1.msra.mxu0 0.0
  %1496 = vmatprep.subr.mxu0 0.0
  %1497 = vmatpush1.msra.mxu0 0.0
  %1498 = vmatprep.subr.mxu0 0.0
  %1499 = vmatpush1.msra.mxu0 0.0
  %1500 = vmatprep.subr.mxu0 0.0
  %1501 = vmatpush1.msra.mxu0 0.0
  %1502 = vmatprep.subr.mxu0 0.0
  %1503 = vmatpush1.msra.mxu0 0.0
  %1504 = vmatprep.subr.mxu0 0.0
  %1505 = vmatpush1.msra.mxu0 0.0
  %1506 = vmatprep.mubr.f32.mxu0 0.0
  %1507 = vmatmul.mubr.f32.gmra.mrb[0].mxu0 %v1416
  %v1508 = vpop.f32.mrb[0].mxu0
  %v1509 = vadd.f32 0.0, %v1508
  %v1510 = vpop.f32.mrb[0].mxu0
  %v1511 = vadd.f32 0.0, %v1510
  %1512 = vmatprep.mubr.f32.mxu0 0.0
  %1513 = vmatmul.mubr.f32.gmra.mrb[0].mxu0 %v1419
  %v1514 = vpop.f32.mrb[0].mxu0
  %v1515 = vadd.f32 0.0, %v1514
  %v1516 = vpop.f32.mrb[0].mxu0
  %v1517 = vadd.f32 0.0, %v1516
  %1518 = vmatprep.mubr.f32.mxu0 0.0
  %1519 = vmatmul.mubr.f32.gmra.mrb[0].mxu0 %v1422
  %v1520 = vpop.f32.mrb[0].mxu0
  %v1521 = vadd.f32 0.0, %v1520
  %v1522 = vpop.f32.mrb[0].mxu0
  %v1523 = vadd.f32 0.0, %v1522
  %1524 = vmatprep.mubr.f32.mxu0 0.0
  %1525 = vmatmul.mubr.f32.gmra.mrb[0].mxu0 %v1425
  %v1526 = vpop.f32.mrb[0].mxu0
  %v1527 = vadd.f32 0.0, %v1526
  %v1528 = vpop.f32.mrb[0].mxu0
  %v1529 = vadd.f32 0.0, %v1528
  %1530 = vmatprep.mubr.f32.mxu0 0.0
  %1531 = vmatmul.mubr.f32.gmra.mrb[0].mxu0 %v1428
  %v1532 = vpop.f32.mrb[0].mxu0
  %v1533 = vadd.f32 0.0, %v1532
  %v1534 = vpop.f32.mrb[0].mxu0
  %v1535 = vadd.f32 0.0, %v1534
  %1536 = vmatprep.mubr.f32.mxu0 0.0
  %1537 = vmatmul.mubr.f32.gmra.mrb[0].mxu0 %v1431
  %v1538 = vpop.f32.mrb[0].mxu0
  %v1539 = vadd.f32 0.0, %v1538
  %v1540 = vpop.f32.mrb[0].mxu0
  %v1541 = vadd.f32 0.0, %v1540
  %1542 = vmatprep.mubr.f32.mxu0 0.0
  %1543 = vmatmul.mubr.f32.gmra.mrb[0].mxu0 %v1434
  %v1544 = vpop.f32.mrb[0].mxu0
  %v1545 = vadd.f32 0.0, %v1544
  %v1546 = vpop.f32.mrb[0].mxu0
  %v1547 = vadd.f32 0.0, %v1546
  %1548 = vmatprep.mubr.f32.mxu0 0.0
  %1549 = vmatmul.mubr.f32.gmra.mrb[0].mxu0 %v1437
  %v1550 = vpop.f32.mrb[0].mxu0
  %v1551 = vadd.f32 0.0, %v1550
  %v1552 = vpop.f32.mrb[0].mxu0
  %v1553 = vadd.f32 0.0, %v1552
  %1554 = vmatprep.mubr.f32.mxu0 0.0
  %1555 = vmatmul.mubr.f32.gmra.mrb[0].mxu0 %v1440
  %v1556 = vpop.f32.mrb[0].mxu0
  %v1557 = vadd.f32 0.0, %v1556
  %v1558 = vpop.f32.mrb[0].mxu0
  %v1559 = vadd.f32 0.0, %v1558
  %1560 = vdwg.mxu0
  %1561 = vmatprep.subr.mxu0 %v579
  %1562 = vmatpush1.msra.mxu0 %v578
  %1563 = vmatprep.subr.mxu0 %v583
  %1564 = vmatpush1.msra.mxu0 %v582
  %1565 = vmatprep.subr.mxu0 0.0
  %1566 = vmatpush1.msra.mxu0 0.0
  %1567 = vmatprep.subr.mxu0 0.0
  %1568 = vmatpush1.msra.mxu0 0.0
  %1569 = vmatprep.subr.mxu0 0.0
  %1570 = vmatpush1.msra.mxu0 0.0
  %1571 = vmatprep.subr.mxu0 0.0
  %1572 = vmatpush1.msra.mxu0 0.0
  %1573 = vmatprep.subr.mxu0 0.0
  %1574 = vmatpush1.msra.mxu0 0.0
  %1575 = vmatprep.subr.mxu0 0.0
  %1576 = vmatpush1.msra.mxu0 0.0
  %1577 = vmatprep.subr.mxu0 0.0
  %1578 = vmatpush1.msra.mxu0 0.0
  %1579 = vmatprep.subr.mxu0 0.0
  %1580 = vmatpush1.msra.mxu0 0.0
  %1581 = vmatprep.subr.mxu0 0.0
  %1582 = vmatpush1.msra.mxu0 0.0
  %1583 = vmatprep.subr.mxu0 0.0
  %1584 = vmatpush1.msra.mxu0 0.0
  %1585 = vmatprep.subr.mxu0 0.0
  %1586 = vmatpush1.msra.mxu0 0.0
  %1587 = vmatprep.subr.mxu0 0.0
  %1588 = vmatpush1.msra.mxu0 0.0
  %1589 = vmatprep.subr.mxu0 0.0
  %1590 = vmatpush1.msra.mxu0 0.0
  %1591 = vmatprep.subr.mxu0 0.0
  %1592 = vmatpush1.msra.mxu0 0.0
  %1593 = vmatprep.subr.mxu0 0.0
  %1594 = vmatpush1.msra.mxu0 0.0
  %1595 = vmatprep.subr.mxu0 0.0
  %1596 = vmatpush1.msra.mxu0 0.0
  %1597 = vmatprep.subr.mxu0 0.0
  %1598 = vmatpush1.msra.mxu0 0.0
  %1599 = vmatprep.subr.mxu0 0.0
  %1600 = vmatpush1.msra.mxu0 0.0
  %1601 = vmatprep.subr.mxu0 0.0
  %1602 = vmatpush1.msra.mxu0 0.0
  %1603 = vmatprep.subr.mxu0 0.0
  %1604 = vmatpush1.msra.mxu0 0.0
  %1605 = vmatprep.subr.mxu0 0.0
  %1606 = vmatpush1.msra.mxu0 0.0
  %1607 = vmatprep.subr.mxu0 0.0
  %1608 = vmatpush1.msra.mxu0 0.0
  %1609 = vmatprep.subr.mxu0 0.0
  %1610 = vmatpush1.msra.mxu0 0.0
  %1611 = vmatprep.subr.mxu0 0.0
  %1612 = vmatpush1.msra.mxu0 0.0
  %1613 = vmatprep.subr.mxu0 0.0
  %1614 = vmatpush1.msra.mxu0 0.0
  %1615 = vmatprep.subr.mxu0 0.0
  %1616 = vmatpush1.msra.mxu0 0.0
  %1617 = vmatprep.subr.mxu0 0.0
  %1618 = vmatpush1.msra.mxu0 0.0
  %1619 = vmatprep.subr.mxu0 0.0
  %1620 = vmatpush1.msra.mxu0 0.0
  %1621 = vmatprep.subr.mxu0 0.0
  %1622 = vmatpush1.msra.mxu0 0.0
  %1623 = vmatprep.subr.mxu0 0.0
  %1624 = vmatpush1.msra.mxu0 0.0
  %1625 = vmatprep.mubr.f32.mxu0 0.0
  %1626 = vmatmul.mubr.f32.gmra.mrb[0].mxu0 %v1416
  %v1627 = vpop.f32.mrb[0].mxu0
  %v1628 = vadd.f32 0.0, %v1627
  %v1629 = vpop.f32.mrb[0].mxu0
  %v1630 = vadd.f32 0.0, %v1629
  %1631 = vmatprep.mubr.f32.mxu0 0.0
  %1632 = vmatmul.mubr.f32.gmra.mrb[0].mxu0 %v1419
  %v1633 = vpop.f32.mrb[0].mxu0
  %v1634 = vadd.f32 0.0, %v1633
  %v1635 = vpop.f32.mrb[0].mxu0
  %v1636 = vadd.f32 0.0, %v1635
  %1637 = vmatprep.mubr.f32.mxu0 0.0
  %1638 = vmatmul.mubr.f32.gmra.mrb[0].mxu0 %v1422
  %v1639 = vpop.f32.mrb[0].mxu0
  %v1640 = vadd.f32 0.0, %v1639
  %v1641 = vpop.f32.mrb[0].mxu0
  %v1642 = vadd.f32 0.0, %v1641
  %1643 = vmatprep.mubr.f32.mxu0 0.0
  %1644 = vmatmul.mubr.f32.gmra.mrb[0].mxu0 %v1425
  %v1645 = vpop.f32.mrb[0].mxu0
  %v1646 = vadd.f32 0.0, %v1645
  %v1647 = vpop.f32.mrb[0].mxu0
  %v1648 = vadd.f32 0.0, %v1647
  %1649 = vmatprep.mubr.f32.mxu0 0.0
  %1650 = vmatmul.mubr.f32.gmra.mrb[0].mxu0 %v1428
  %v1651 = vpop.f32.mrb[0].mxu0
  %v1652 = vadd.f32 0.0, %v1651
  %v1653 = vpop.f32.mrb[0].mxu0
  %v1654 = vadd.f32 0.0, %v1653
  %1655 = vmatprep.mubr.f32.mxu0 0.0
  %1656 = vmatmul.mubr.f32.gmra.mrb[0].mxu0 %v1431
  %v1657 = vpop.f32.mrb[0].mxu0
  %v1658 = vadd.f32 0.0, %v1657
  %v1659 = vpop.f32.mrb[0].mxu0
  %v1660 = vadd.f32 0.0, %v1659
  %1661 = vmatprep.mubr.f32.mxu0 0.0
  %1662 = vmatmul.mubr.f32.gmra.mrb[0].mxu0 %v1434
  %v1663 = vpop.f32.mrb[0].mxu0
  %v1664 = vadd.f32 0.0, %v1663
  %v1665 = vpop.f32.mrb[0].mxu0
  %v1666 = vadd.f32 0.0, %v1665
  %1667 = vmatprep.mubr.f32.mxu0 0.0
  %1668 = vmatmul.mubr.f32.gmra.mrb[0].mxu0 %v1437
  %v1669 = vpop.f32.mrb[0].mxu0
  %v1670 = vadd.f32 0.0, %v1669
  %v1671 = vpop.f32.mrb[0].mxu0
  %v1672 = vadd.f32 0.0, %v1671
  %1673 = vmatprep.mubr.f32.mxu0 0.0
  %1674 = vmatmul.mubr.f32.gmra.mrb[0].mxu0 %v1440
  %v1675 = vpop.f32.mrb[0].mxu0
  %v1676 = vadd.f32 0.0, %v1675
  %v1677 = vpop.f32.mrb[0].mxu0
  %v1678 = vadd.f32 0.0, %v1677
  %1679 = vdwg.mxu0
  %v1680 = vmul.f32 %v1160, %v1509
  %v1681 = vmul.f32 %v1162, %v1511
  %v1682 = vmul.f32 %v1321, %v1628
  %v1683 = vmul.f32 %v1323, %v1630
  %v1684 = vmul.f32 %v1166, %v1515
  %v1685 = vmul.f32 %v1168, %v1517
  %v1686 = vmul.f32 %v1327, %v1634
  %v1687 = vmul.f32 %v1329, %v1636
  %v1688 = vmul.f32 %v1172, %v1521
  %v1689 = vmul.f32 %v1174, %v1523
  %v1690 = vmul.f32 %v1333, %v1640
  %v1691 = vmul.f32 %v1335, %v1642
  %v1692 = vmul.f32 %v1178, %v1527
  %v1693 = vmul.f32 %v1180, %v1529
  %v1694 = vmul.f32 %v1339, %v1646
  %v1695 = vmul.f32 %v1341, %v1648
  %v1696 = vmul.f32 %v1184, %v1533
  %v1697 = vmul.f32 %v1186, %v1535
  %v1698 = vmul.f32 %v1345, %v1652
  %v1699 = vmul.f32 %v1347, %v1654
  %v1700 = vmul.f32 %v1190, %v1539
  %v1701 = vmul.f32 %v1192, %v1541
  %v1702 = vmul.f32 %v1351, %v1658
  %v1703 = vmul.f32 %v1353, %v1660
  %v1704 = vmul.f32 %v1196, %v1545
  %v1705 = vmul.f32 %v1198, %v1547
  %v1706 = vmul.f32 %v1357, %v1664
  %v1707 = vmul.f32 %v1359, %v1666
  %v1708 = vmul.f32 %v1202, %v1551
  %v1709 = vmul.f32 %v1204, %v1553
  %v1710 = vmul.f32 %v1363, %v1670
  %v1711 = vmul.f32 %v1365, %v1672
  %v1712 = vmul.f32 %v1208, %v1509
  %v1713 = vmul.f32 %v1210, %v1511
  %v1714 = vmul.f32 %v1369, %v1628
  %v1715 = vmul.f32 %v1371, %v1630
  %v1716 = vmul.f32 %v1214, %v1515
  %v1717 = vmul.f32 %v1216, %v1517
  %v1718 = vmul.f32 %v1375, %v1634
  %v1719 = vmul.f32 %v1377, %v1636
  %v1720 = vmul.f32 %v1220, %v1521
  %v1721 = vmul.f32 %v1222, %v1523
  %v1722 = vmul.f32 %v1381, %v1640
  %v1723 = vmul.f32 %v1383, %v1642
  %v1724 = vmul.f32 %v1226, %v1527
  %v1725 = vmul.f32 %v1228, %v1529
  %v1726 = vmul.f32 %v1387, %v1646
  %v1727 = vmul.f32 %v1389, %v1648
  %v1728 = vmul.f32 %v1232, %v1533
  %v1729 = vmul.f32 %v1234, %v1535
  %v1730 = vmul.f32 %v1393, %v1652
  %v1731 = vmul.f32 %v1395, %v1654
  %v1732 = vmul.f32 %v1238, %v1539
  %v1733 = vmul.f32 %v1240, %v1541
  %v1734 = vmul.f32 %v1399, %v1658
  %v1735 = vmul.f32 %v1401, %v1660
  %v1736 = vmul.f32 %v1244, %v1545
  %v1737 = vmul.f32 %v1246, %v1547
  %v1738 = vmul.f32 %v1405, %v1664
  %v1739 = vmul.f32 %v1407, %v1666
  %v1740 = vmul.f32 %v1250, %v1551
  %v1741 = vmul.f32 %v1252, %v1553
  %v1742 = vmul.f32 %v1411, %v1670
  %v1743 = vmul.f32 %v1413, %v1672
  %v1745 = vlaneseq
  %v1746 = vshrl.u32 %v1745, 7
  %v1747 = vsub.s32 0, %v1746
  %v1748 = vrot.slane %v585, %v1747
  %v1749 = vlaneseq
  %v1750 = vshrl.u32 %v1749, 7
  %v1751 = vsub.s32 1, %v1750
  %v1752 = vrot.slane %v585, %v1751
  %v1753 = vlaneseq
  %v1754 = vshrl.u32 %v1753, 7
  %v1755 = vsub.s32 2, %v1754
  %v1756 = vrot.slane %v585, %v1755
  %v1757 = vlaneseq
  %v1758 = vshrl.u32 %v1757, 7
  %v1759 = vsub.s32 3, %v1758
  %v1760 = vrot.slane %v585, %v1759
  %v1765 = vsub.f32 1.0, %v1680
  %v1766 = vsub.f32 1.0, %v1681
  %v1767 = vsub.f32 1.0, %v1682
  %v1768 = vsub.f32 1.0, %v1683
  %v1769 = vmul.f32 %v1748, %v1765
  %v1770 = vmul.f32 %v1752, %v1766
  %v1771 = vmul.f32 %v1756, %v1767
  %v1772 = vmul.f32 %v1760, %v1768
  %v1773 = vadd.f32 %v1769, %v1712
  %v1774 = vadd.f32 %v1770, %v1713
  %v1775 = vadd.f32 %v1771, %v1714
  %v1776 = vadd.f32 %v1772, %v1715
  %v1777 = vsub.f32 1.0, %v1684
  %v1778 = vsub.f32 1.0, %v1685
  %v1779 = vsub.f32 1.0, %v1686
  %v1780 = vsub.f32 1.0, %v1687
  %v1781 = vmul.f32 %v1773, %v1777
  %v1782 = vmul.f32 %v1774, %v1778
  %v1783 = vmul.f32 %v1775, %v1779
  %v1784 = vmul.f32 %v1776, %v1780
  %v1785 = vadd.f32 %v1781, %v1716
  %v1786 = vadd.f32 %v1782, %v1717
  %v1787 = vadd.f32 %v1783, %v1718
  %v1788 = vadd.f32 %v1784, %v1719
  %v1789 = vsub.f32 1.0, %v1688
  %v1790 = vsub.f32 1.0, %v1689
  %v1791 = vsub.f32 1.0, %v1690
  %v1792 = vsub.f32 1.0, %v1691
  %v1793 = vmul.f32 %v1785, %v1789
  %v1794 = vmul.f32 %v1786, %v1790
  %v1795 = vmul.f32 %v1787, %v1791
  %v1796 = vmul.f32 %v1788, %v1792
  %v1797 = vadd.f32 %v1793, %v1720
  %v1798 = vadd.f32 %v1794, %v1721
  %v1799 = vadd.f32 %v1795, %v1722
  %v1800 = vadd.f32 %v1796, %v1723
  %v1801 = vsub.f32 1.0, %v1692
  %v1802 = vsub.f32 1.0, %v1693
  %v1803 = vsub.f32 1.0, %v1694
  %v1804 = vsub.f32 1.0, %v1695
  %v1805 = vmul.f32 %v1797, %v1801
  %v1806 = vmul.f32 %v1798, %v1802
  %v1807 = vmul.f32 %v1799, %v1803
  %v1808 = vmul.f32 %v1800, %v1804
  %v1809 = vadd.f32 %v1805, %v1724
  %v1810 = vadd.f32 %v1806, %v1725
  %v1811 = vadd.f32 %v1807, %v1726
  %v1812 = vadd.f32 %v1808, %v1727
  %v1813 = vsub.f32 1.0, %v1696
  %v1814 = vsub.f32 1.0, %v1697
  %v1815 = vsub.f32 1.0, %v1698
  %v1816 = vsub.f32 1.0, %v1699
  %v1817 = vmul.f32 %v1809, %v1813
  %v1818 = vmul.f32 %v1810, %v1814
  %v1819 = vmul.f32 %v1811, %v1815
  %v1820 = vmul.f32 %v1812, %v1816
  %v1821 = vadd.f32 %v1817, %v1728
  %v1822 = vadd.f32 %v1818, %v1729
  %v1823 = vadd.f32 %v1819, %v1730
  %v1824 = vadd.f32 %v1820, %v1731
  %v1825 = vsub.f32 1.0, %v1700
  %v1826 = vsub.f32 1.0, %v1701
  %v1827 = vsub.f32 1.0, %v1702
  %v1828 = vsub.f32 1.0, %v1703
  %v1829 = vmul.f32 %v1821, %v1825
  %v1830 = vmul.f32 %v1822, %v1826
  %v1831 = vmul.f32 %v1823, %v1827
  %v1832 = vmul.f32 %v1824, %v1828
  %v1833 = vadd.f32 %v1829, %v1732
  %v1834 = vadd.f32 %v1830, %v1733
  %v1835 = vadd.f32 %v1831, %v1734
  %v1836 = vadd.f32 %v1832, %v1735
  %v1837 = vsub.f32 1.0, %v1704
  %v1838 = vsub.f32 1.0, %v1705
  %v1839 = vsub.f32 1.0, %v1706
  %v1840 = vsub.f32 1.0, %v1707
  %v1841 = vmul.f32 %v1833, %v1837
  %v1842 = vmul.f32 %v1834, %v1838
  %v1843 = vmul.f32 %v1835, %v1839
  %v1844 = vmul.f32 %v1836, %v1840
  %v1845 = vadd.f32 %v1841, %v1736
  %v1846 = vadd.f32 %v1842, %v1737
  %v1847 = vadd.f32 %v1843, %v1738
  %v1848 = vadd.f32 %v1844, %v1739
  %v1849 = vsub.f32 1.0, %v1708
  %v1850 = vsub.f32 1.0, %v1709
  %v1851 = vsub.f32 1.0, %v1710
  %v1852 = vsub.f32 1.0, %v1711
  %v1853 = vmul.f32 %v1845, %v1849
  %v1854 = vmul.f32 %v1846, %v1850
  %v1855 = vmul.f32 %v1847, %v1851
  %v1856 = vmul.f32 %v1848, %v1852
  %v1857 = vadd.f32 %v1853, %v1740
  %v1858 = vadd.f32 %v1854, %v1741
  %v1859 = vadd.f32 %v1855, %v1742
  %v1860 = vadd.f32 %v1856, %v1743
  %v1861 = vmul.f32 %v1857, %v1557
  %v1862 = vmul.f32 %v1858, %v1559
  %v1863 = vmul.f32 %v1859, %v1676
  %v1864 = vmul.f32 %v1860, %v1678
  %1865 = vmatprep.subr.mxu0 0.0
  %1866 = vmatpush1.msra.mxu0 %v485
  %1867 = vmatprep.subr.mxu0 0.0
  %1868 = vmatpush1.msra.mxu0 %v486
  %1869 = vmatprep.subr.mxu0 0.0
  %1870 = vmatpush1.msra.mxu0 %v487
  %1871 = vmatprep.subr.mxu0 0.0
  %1872 = vmatpush1.msra.mxu0 %v488
  %1873 = vmatprep.subr.mxu0 0.0
  %1874 = vmatpush1.msra.mxu0 %v489
  %1875 = vmatprep.subr.mxu0 0.0
  %1876 = vmatpush1.msra.mxu0 %v490
  %1877 = vmatprep.subr.mxu0 0.0
  %1878 = vmatpush1.msra.mxu0 %v491
  %1879 = vmatprep.subr.mxu0 0.0
  %1880 = vmatpush1.msra.mxu0 %v492
  %1881 = vmatprep.subr.mxu0 0.0
  %1882 = vmatpush1.msra.mxu0 %v493
  %1883 = vmatprep.subr.mxu0 0.0
  %1884 = vmatpush1.msra.mxu0 %v494
  %1885 = vmatprep.subr.mxu0 0.0
  %1886 = vmatpush1.msra.mxu0 %v495
  %1887 = vmatprep.subr.mxu0 0.0
  %1888 = vmatpush1.msra.mxu0 %v496
  %1889 = vmatprep.subr.mxu0 0.0
  %1890 = vmatpush1.msra.mxu0 %v497
  %1891 = vmatprep.subr.mxu0 0.0
  %1892 = vmatpush1.msra.mxu0 %v498
  %1893 = vmatprep.subr.mxu0 0.0
  %1894 = vmatpush1.msra.mxu0 %v499
  %1895 = vmatprep.subr.mxu0 0.0
  %1896 = vmatpush1.msra.mxu0 %v500
  %1897 = vmatprep.subr.mxu0 0.0
  %1898 = vmatpush1.msra.mxu0 %v501
  %1899 = vmatprep.subr.mxu0 0.0
  %1900 = vmatpush1.msra.mxu0 %v502
  %1901 = vmatprep.subr.mxu0 0.0
  %1902 = vmatpush1.msra.mxu0 %v503
  %1903 = vmatprep.subr.mxu0 0.0
  %1904 = vmatpush1.msra.mxu0 %v504
  %1905 = vmatprep.subr.mxu0 0.0
  %1906 = vmatpush1.msra.mxu0 %v505
  %1907 = vmatprep.subr.mxu0 0.0
  %1908 = vmatpush1.msra.mxu0 %v506
  %1909 = vmatprep.subr.mxu0 0.0
  %1910 = vmatpush1.msra.mxu0 %v507
  %1911 = vmatprep.subr.mxu0 0.0
  %1912 = vmatpush1.msra.mxu0 %v508
  %1913 = vmatprep.subr.mxu0 0.0
  %1914 = vmatpush1.msra.mxu0 %v509
  %1915 = vmatprep.subr.mxu0 0.0
  %1916 = vmatpush1.msra.mxu0 %v510
  %1917 = vmatprep.subr.mxu0 0.0
  %1918 = vmatpush1.msra.mxu0 %v511
  %1919 = vmatprep.subr.mxu0 0.0
  %1920 = vmatpush1.msra.mxu0 %v512
  %1921 = vmatprep.subr.mxu0 0.0
  %1922 = vmatpush1.msra.mxu0 %v513
  %1923 = vmatprep.subr.mxu0 0.0
  %1924 = vmatpush1.msra.mxu0 %v514
  %1925 = vmatprep.subr.mxu0 0.0
  %1926 = vmatpush1.msra.mxu0 %v515
  %1927 = vmatprep.subr.mxu0 0.0
  %1928 = vmatpush1.msra.mxu0 %v516
  %1929 = vmatprep.mubr.f32.mxu0 %v1862
  %1930 = vmatmul.mubr.f32.gmra.mrb[0].mxu0 %v1861
  %v1931 = vpop.f32.mrb[0].mxu0
  %v1932 = vadd.f32 0.0, %v1931
  %v1933 = vpop.f32.mrb[0].mxu0
  %1934 = vdwg.mxu0
  %1935 = vmatprep.subr.mxu0 0.0
  %1936 = vmatpush1.msra.mxu0 %v517
  %1937 = vmatprep.subr.mxu0 0.0
  %1938 = vmatpush1.msra.mxu0 %v518
  %1939 = vmatprep.subr.mxu0 0.0
  %1940 = vmatpush1.msra.mxu0 %v519
  %1941 = vmatprep.subr.mxu0 0.0
  %1942 = vmatpush1.msra.mxu0 %v520
  %1943 = vmatprep.subr.mxu0 0.0
  %1944 = vmatpush1.msra.mxu0 %v521
  %1945 = vmatprep.subr.mxu0 0.0
  %1946 = vmatpush1.msra.mxu0 %v522
  %1947 = vmatprep.subr.mxu0 0.0
  %1948 = vmatpush1.msra.mxu0 %v523
  %1949 = vmatprep.subr.mxu0 0.0
  %1950 = vmatpush1.msra.mxu0 %v524
  %1951 = vmatprep.subr.mxu0 0.0
  %1952 = vmatpush1.msra.mxu0 %v525
  %1953 = vmatprep.subr.mxu0 0.0
  %1954 = vmatpush1.msra.mxu0 %v526
  %1955 = vmatprep.subr.mxu0 0.0
  %1956 = vmatpush1.msra.mxu0 %v527
  %1957 = vmatprep.subr.mxu0 0.0
  %1958 = vmatpush1.msra.mxu0 %v528
  %1959 = vmatprep.subr.mxu0 0.0
  %1960 = vmatpush1.msra.mxu0 %v529
  %1961 = vmatprep.subr.mxu0 0.0
  %1962 = vmatpush1.msra.mxu0 %v530
  %1963 = vmatprep.subr.mxu0 0.0
  %1964 = vmatpush1.msra.mxu0 %v531
  %1965 = vmatprep.subr.mxu0 0.0
  %1966 = vmatpush1.msra.mxu0 %v532
  %1967 = vmatprep.subr.mxu0 0.0
  %1968 = vmatpush1.msra.mxu0 %v533
  %1969 = vmatprep.subr.mxu0 0.0
  %1970 = vmatpush1.msra.mxu0 %v534
  %1971 = vmatprep.subr.mxu0 0.0
  %1972 = vmatpush1.msra.mxu0 %v535
  %1973 = vmatprep.subr.mxu0 0.0
  %1974 = vmatpush1.msra.mxu0 %v536
  %1975 = vmatprep.subr.mxu0 0.0
  %1976 = vmatpush1.msra.mxu0 %v537
  %1977 = vmatprep.subr.mxu0 0.0
  %1978 = vmatpush1.msra.mxu0 %v538
  %1979 = vmatprep.subr.mxu0 0.0
  %1980 = vmatpush1.msra.mxu0 %v539
  %1981 = vmatprep.subr.mxu0 0.0
  %1982 = vmatpush1.msra.mxu0 %v540
  %1983 = vmatprep.subr.mxu0 0.0
  %1984 = vmatpush1.msra.mxu0 %v541
  %1985 = vmatprep.subr.mxu0 0.0
  %1986 = vmatpush1.msra.mxu0 %v542
  %1987 = vmatprep.subr.mxu0 0.0
  %1988 = vmatpush1.msra.mxu0 %v543
  %1989 = vmatprep.subr.mxu0 0.0
  %1990 = vmatpush1.msra.mxu0 %v544
  %1991 = vmatprep.subr.mxu0 0.0
  %1992 = vmatpush1.msra.mxu0 %v545
  %1993 = vmatprep.subr.mxu0 0.0
  %1994 = vmatpush1.msra.mxu0 %v546
  %1995 = vmatprep.subr.mxu0 0.0
  %1996 = vmatpush1.msra.mxu0 %v547
  %1997 = vmatprep.subr.mxu0 0.0
  %1998 = vmatpush1.msra.mxu0 %v548
  %1999 = vmatprep.mubr.f32.mxu0 %v1864
  %2000 = vmatmul.mubr.f32.gmra.mrb[0].mxu0 %v1863
  %v2001 = vpop.f32.mrb[0].mxu0
  %v2002 = vadd.f32 %v1932, %v2001
  %v2003 = vpop.f32.mrb[0].mxu0
  %2004 = vdwg.mxu0
  %2005 = vrot.lane.b32.xlu0 %v474, 32
  %v2006 = vpop.permute.xlu0 %2005
  %v2008 = vsel %vm590, %v2002, %v2006
  %v2009 = vlaneseq
  %v2010 = vshrl.u32 %v2009, 7
  %v2011 = vsub.s32 0, %v2010
  %v2012 = vrot.slane %v558, %v2011
  %vm2013 = vcmask 523264
  %v2015 = vsel %vm2013, %v2008, 0
  %2017 = vmatprep.subr.mxu0 0.0
  %2018 = vmatpush1.msra.mxu0 %v549
  %2019 = vmatprep.subr.mxu0 0.0
  %2020 = vmatpush1.msra.mxu0 %v550
  %2021 = vmatprep.subr.mxu0 0.0
  %2022 = vmatpush1.msra.mxu0 %v551
  %2023 = vmatprep.subr.mxu0 0.0
  %2024 = vmatpush1.msra.mxu0 %v552
  %2025 = vmatprep.subr.mxu0 0.0
  %2026 = vmatpush1.msra.mxu0 %v553
  %2027 = vmatprep.subr.mxu0 0.0
  %2028 = vmatpush1.msra.mxu0 %v554
  %2029 = vmatprep.subr.mxu0 0.0
  %2030 = vmatpush1.msra.mxu0 %v555
  %2031 = vmatprep.subr.mxu0 0.0
  %2032 = vmatpush1.msra.mxu0 %v556
  %2033 = vmatprep.subr.mxu0 0.0
  %2034 = vmatpush1.msra.mxu0 0.0
  %2035 = vmatprep.subr.mxu0 0.0
  %2036 = vmatpush1.msra.mxu0 0.0
  %2037 = vmatprep.subr.mxu0 0.0
  %2038 = vmatpush1.msra.mxu0 0.0
  %2039 = vmatprep.subr.mxu0 0.0
  %2040 = vmatpush1.msra.mxu0 0.0
  %2041 = vmatprep.subr.mxu0 0.0
  %2042 = vmatpush1.msra.mxu0 0.0
  %2043 = vmatprep.subr.mxu0 0.0
  %2044 = vmatpush1.msra.mxu0 0.0
  %2045 = vmatprep.subr.mxu0 0.0
  %2046 = vmatpush1.msra.mxu0 0.0
  %2047 = vmatprep.subr.mxu0 0.0
  %2048 = vmatpush1.msra.mxu0 0.0
  %2049 = vmatprep.subr.mxu0 0.0
  %2050 = vmatpush1.msra.mxu0 0.0
  %2051 = vmatprep.subr.mxu0 0.0
  %2052 = vmatpush1.msra.mxu0 0.0
  %2053 = vmatprep.subr.mxu0 0.0
  %2054 = vmatpush1.msra.mxu0 0.0
  %2055 = vmatprep.subr.mxu0 0.0
  %2056 = vmatpush1.msra.mxu0 0.0
  %2057 = vmatprep.subr.mxu0 0.0
  %2058 = vmatpush1.msra.mxu0 0.0
  %2059 = vmatprep.subr.mxu0 0.0
  %2060 = vmatpush1.msra.mxu0 0.0
  %2061 = vmatprep.subr.mxu0 0.0
  %2062 = vmatpush1.msra.mxu0 0.0
  %2063 = vmatprep.subr.mxu0 0.0
  %2064 = vmatpush1.msra.mxu0 0.0
  %2065 = vmatprep.subr.mxu0 0.0
  %2066 = vmatpush1.msra.mxu0 0.0
  %2067 = vmatprep.subr.mxu0 0.0
  %2068 = vmatpush1.msra.mxu0 0.0
  %2069 = vmatprep.subr.mxu0 0.0
  %2070 = vmatpush1.msra.mxu0 0.0
  %2071 = vmatprep.subr.mxu0 0.0
  %2072 = vmatpush1.msra.mxu0 0.0
  %2073 = vmatprep.subr.mxu0 0.0
  %2074 = vmatpush1.msra.mxu0 0.0
  %2075 = vmatprep.subr.mxu0 0.0
  %2076 = vmatpush1.msra.mxu0 0.0
  %2077 = vmatprep.subr.mxu0 0.0
  %2078 = vmatpush1.msra.mxu0 0.0
  %2079 = vmatprep.subr.mxu0 0.0
  %2080 = vmatpush1.msra.mxu0 0.0
  %2081 = vmatprep.mubr.f32.mxu0 0.0
  %2082 = vmatmul.mubr.f32.gmra.mrb[0].mxu0 %v2015
  %v2083 = vpop.f32.mrb[0].mxu0
  %v2084 = vadd.f32 %v2012, %v2083
  %v2085 = vpop.f32.mrb[0].mxu0
  %2086 = vdwg.mxu0
  %v2087 = vtanh.pop %v2084
  %v2088 = vlaneseq
  %v2089 = vshrl.u32 %v2088, 7
  %v2090 = vsub.s32 0, %v2089
  %v2091 = vrot.slane %v559, %v2090
  %v2093 = vsel %vm590, %v2087, 0
  %2095 = vmatprep.subr.mxu0 0.0
  %2096 = vmatpush1.msra.mxu0 %v477
  %2097 = vmatprep.subr.mxu0 0.0
  %2098 = vmatpush1.msra.mxu0 %v478
  %2099 = vmatprep.subr.mxu0 0.0
  %2100 = vmatpush1.msra.mxu0 %v479
  %2101 = vmatprep.subr.mxu0 0.0
  %2102 = vmatpush1.msra.mxu0 %v480
  %2103 = vmatprep.subr.mxu0 0.0
  %2104 = vmatpush1.msra.mxu0 0.0
  %2105 = vmatprep.subr.mxu0 0.0
  %2106 = vmatpush1.msra.mxu0 0.0
  %2107 = vmatprep.subr.mxu0 0.0
  %2108 = vmatpush1.msra.mxu0 0.0
  %2109 = vmatprep.subr.mxu0 0.0
  %2110 = vmatpush1.msra.mxu0 0.0
  %2111 = vmatprep.subr.mxu0 0.0
  %2112 = vmatpush1.msra.mxu0 0.0
  %2113 = vmatprep.subr.mxu0 0.0
  %2114 = vmatpush1.msra.mxu0 0.0
  %2115 = vmatprep.subr.mxu0 0.0
  %2116 = vmatpush1.msra.mxu0 0.0
  %2117 = vmatprep.subr.mxu0 0.0
  %2118 = vmatpush1.msra.mxu0 0.0
  %2119 = vmatprep.subr.mxu0 0.0
  %2120 = vmatpush1.msra.mxu0 0.0
  %2121 = vmatprep.subr.mxu0 0.0
  %2122 = vmatpush1.msra.mxu0 0.0
  %2123 = vmatprep.subr.mxu0 0.0
  %2124 = vmatpush1.msra.mxu0 0.0
  %2125 = vmatprep.subr.mxu0 0.0
  %2126 = vmatpush1.msra.mxu0 0.0
  %2127 = vmatprep.subr.mxu0 0.0
  %2128 = vmatpush1.msra.mxu0 0.0
  %2129 = vmatprep.subr.mxu0 0.0
  %2130 = vmatpush1.msra.mxu0 0.0
  %2131 = vmatprep.subr.mxu0 0.0
  %2132 = vmatpush1.msra.mxu0 0.0
  %2133 = vmatprep.subr.mxu0 0.0
  %2134 = vmatpush1.msra.mxu0 0.0
  %2135 = vmatprep.subr.mxu0 0.0
  %2136 = vmatpush1.msra.mxu0 0.0
  %2137 = vmatprep.subr.mxu0 0.0
  %2138 = vmatpush1.msra.mxu0 0.0
  %2139 = vmatprep.subr.mxu0 0.0
  %2140 = vmatpush1.msra.mxu0 0.0
  %2141 = vmatprep.subr.mxu0 0.0
  %2142 = vmatpush1.msra.mxu0 0.0
  %2143 = vmatprep.subr.mxu0 0.0
  %2144 = vmatpush1.msra.mxu0 0.0
  %2145 = vmatprep.subr.mxu0 0.0
  %2146 = vmatpush1.msra.mxu0 0.0
  %2147 = vmatprep.subr.mxu0 0.0
  %2148 = vmatpush1.msra.mxu0 0.0
  %2149 = vmatprep.subr.mxu0 0.0
  %2150 = vmatpush1.msra.mxu0 0.0
  %2151 = vmatprep.subr.mxu0 0.0
  %2152 = vmatpush1.msra.mxu0 0.0
  %2153 = vmatprep.subr.mxu0 0.0
  %2154 = vmatpush1.msra.mxu0 0.0
  %2155 = vmatprep.subr.mxu0 0.0
  %2156 = vmatpush1.msra.mxu0 0.0
  %2157 = vmatprep.subr.mxu0 0.0
  %2158 = vmatpush1.msra.mxu0 0.0
  %2159 = vmatprep.mubr.f32.mxu0 0.0
  %2160 = vmatmul.mubr.f32.gmra.mrb[0].mxu0 %v2093
  %v2161 = vpop.f32.mrb[0].mxu0
  %v2162 = vadd.f32 %v2091, %v2161
  %v2163 = vpop.f32.mrb[0].mxu0
  %2164 = vdwg.mxu0
  %2165 = vst [vmem:[%s6] sm:$0xff] %v2162
  // Predicated region
  $region26: #{dkvmn_forward.1} parent=0 // pred_check
    _
  $region27: #{dkvmn_forward.1} parent=0 // pred_check_branch
    %2167 = sbr.rel (0) target = $region29
  $region28: #{dkvmn_forward.1} parent=0 // pred_region
    _
  $region29: #{dkvmn_forward.1} parent=0 // pred_fallthru
    _
  // Predicated region
  $region30: #{dkvmn_forward.1} parent=0 // pred_check
    _
  $region31: #{dkvmn_forward.1} parent=0 // pred_check_branch
    %2169 = sbr.rel (0) target = $region33
  $region32: #{dkvmn_forward.1} parent=0 // pred_region
    _
  $region33: #{dkvmn_forward.1} parent=0 // pred_fallthru
    _

</llo_original>
